<compile_context>
chip_gen: v5e
topology: v5e:2x2
jax: 0.10.0
libtpu: 0.0.40
codegen_flags: <defaults>
</compile_context>

<pallas_src>
import functools

import jax
import jax.numpy as jnp
import numpy as np
from jax import lax
from jax.experimental import pallas as pl
from jax.experimental.pallas import tpu as pltpu

EPS = 1e-5


def _build_tap_masks(N, H, W):
  """Per-tap validity masks, shape (9, N*H*W) f32.

  mask[j, p] == 1 iff tap j = ky*3+kx applied at output position p = (n, h, w)
  reads an in-bounds pixel (h+ky-1, w+kx-1) of the SAME image; 0 otherwise.
  Multiplying the shifted per-tap products by this mask implements the conv's
  zero padding and stops row/image wrap-around of the flat spatial axis.
  """
  hw = np.arange(H * W)
  wp = hw % W
  hp = hw // W
  masks = np.ones((9, N * H * W), np.float32)
  for ky in range(3):
    for kx in range(3):
      oy, ox = ky - 1, kx - 1
      m = np.ones(H * W, np.float32)
      if ox == 1:
        m = m * (wp < W - 1)
      elif ox == -1:
        m = m * (wp > 0)
      if oy == 1:
        m = m * (hp < H - 1)
      elif oy == -1:
        m = m * (hp > 0)
      masks[ky * 3 + kx] = np.tile(m, N)
  return masks


def _dense_block_kernel(*refs, N, H, W, C0, growth, num_layers, lane_pad):
  """Fused DenseBlock forward, channel-major.

  refs = [x, masks,
          gamma_0, beta_0, w_0, ..., gamma_{L-1}, beta_{L-1}, w_{L-1},
          out, t_scratch, mean_scratch, var_scratch]

  x:       (C0, nhw)                  f32   input features (channel-major)
  masks:   (9, nhw)                   f32   per-tap boundary masks
  gamma_i: (cin_i, 1)                 f32   BN scale
  beta_i:  (cin_i, 1)                 f32   BN shift
  w_i:     (9*growth, cin_i)          bf16  conv weights, row=(ky*3+kx)*growth+co
  out:     (c_total, nhw)             f32   final concat; ALSO the growing
                                            in-VMEM dense-concat feature buffer
  t:       (9*growth, nhw+2*lane_pad) f32   zero-lane-padded per-tap products
  mean/var:(cmax, 1)                  f32   cached per-channel batch statistics
  """
  num_in = 2 + 3 * num_layers
  x_ref, mask_ref = refs[0], refs[1]
  param_refs = refs[2:num_in]
  out_ref = refs[num_in]
  t_ref, mean_ref, var_ref = refs[num_in + 1:]

  nhw = N * H * W
  inv_nhw = 1.0 / float(nhw)

  # Zero the per-tap scratch once: only the lane pads must stay zero (the centre
  # window [lane_pad, lane_pad+nhw) is fully rewritten every layer).
  t_ref[...] = jnp.zeros_like(t_ref)

  # Seed the resident feature buffer with the input and cache its per-channel
  # batch stats in a single pass (sum & sum of squares -> mean, biased var).
  feat0 = x_ref[...]
  out_ref[0:C0, :] = feat0
  m0 = jnp.sum(feat0, axis=1, keepdims=True) * inv_nhw
  sq0 = jnp.sum(feat0 * feat0, axis=1, keepdims=True) * inv_nhw
  mean_ref[0:C0, :] = m0
  # One-pass variance E[x^2]-E[x]^2: fine in f32 for these O(1) activations;
  # clamp at 0 against rounding.
  var_ref[0:C0, :] = jnp.maximum(sq0 - m0 * m0, 0.0)

  cin = C0
  for i in range(num_layers):  # static unroll (L=3); see TODO for deep blocks
    gamma = param_refs[3 * i][...]        # (cin, 1)
    beta = param_refs[3 * i + 1][...]     # (cin, 1)
    w_all = param_refs[3 * i + 2][...]    # (9*growth, cin) bf16

    # ---- BatchNorm (cached batch stats, folded to scale/shift) + ReLU, f32 ----
    scale = gamma * lax.rsqrt(var_ref[0:cin, :] + EPS)        # (cin, 1)
    shift = beta - mean_ref[0:cin, :] * scale                 # (cin, 1)
    y = jnp.maximum(out_ref[0:cin, :] * scale + shift, 0.0)   # (cin, nhw) f32
    y_bf = y.astype(jnp.bfloat16)                             # MXU operand only

    # ---- one MXU matmul per layer: UNSHIFTED products for all 9 taps ----
    # t[(ky*3+kx)*growth + co, q] = sum_ci w[co, ci, ky, kx] * y[ci, q]
    t = jnp.dot(w_all, y_bf, preferred_element_type=jnp.float32)
    t_ref[:, pl.ds(lane_pad, nhw)] = t                        # lane-aligned store

    # ---- combine taps: the conv output at flat position p needs t_j[p+off_j].
    # That is a static-offset window into the zero-padded t_ref, masked so that
    # contributions crossing a row/image boundary vanish (== zero padding).
    acc = t_ref[pl.ds(4 * growth, growth), pl.ds(lane_pad, nhw)]   # centre tap
    for ky in range(3):
      for kx in range(3):
        if ky == 1 and kx == 1:
          continue
        j = ky * 3 + kx
        off = (ky - 1) * W + (kx - 1)
        tap = t_ref[pl.ds(j * growth, growth), pl.ds(lane_pad + off, nhw)]
        acc = acc + tap * mask_ref[pl.ds(j, 1), :]

    # Append this layer's output to the dense-concat buffer (lane-dense store).
    out_ref[cin:cin + growth, :] = acc

    # Cache batch stats of the newly appended channels for the next layer's BN
    # (stats of older channels are unchanged, so they are never recomputed).
    if i < num_layers - 1:
      m = jnp.sum(acc, axis=1, keepdims=True) * inv_nhw
      sq = jnp.sum(acc * acc, axis=1, keepdims=True) * inv_nhw
      mean_ref[cin:cin + growth, :] = m
      var_ref[cin:cin + growth, :] = jnp.maximum(sq - m * m, 0.0)
    cin += growth


def dense_block_forward(x, params):
  """DenseBlock.forward for NCHW input, fully fused into one pallas_call."""
  N, C0, H, W = x.shape
  growth = params[0][2].shape[0]
  num_layers = len(params)
  c_total = C0 + num_layers * growth
  cmax = C0 + (num_layers - 1) * growth      # widest input any BN/conv sees
  nhw = N * H * W
  lane_pad = 128 * ((W + 1 + 127) // 128)    # >= W+1 and 128-aligned

  # Channel-major flatten: (N, C, H, W) -> (C, N*H*W).
  x_cm = jnp.transpose(x, (1, 0, 2, 3)).reshape(C0, nhw).astype(jnp.float32)
  masks = jnp.asarray(_build_tap_masks(N, H, W))

  flat_inputs = [x_cm, masks]
  flops = 0
  bytes_accessed = x_cm.size * 4 + masks.size * 4 + c_total * nhw * 4
  for gamma, beta, w in params:
    cin = w.shape[1]
    flat_inputs += [
        gamma.reshape(cin, 1).astype(jnp.float32),
        beta.reshape(cin, 1).astype(jnp.float32),
        # OIHW (growth, cin, 3, 3) -> (9*growth, cin): row = (ky*3+kx)*growth+co,
        # matching the per-tap row blocks of t in the kernel.  bf16 for the MXU.
        jnp.transpose(w, (2, 3, 0, 1)).reshape(9 * growth, cin)
        .astype(jnp.bfloat16),
    ]
    flops += 2 * 9 * growth * cin * nhw + 10 * cin * nhw
    bytes_accessed += (gamma.size + beta.size) * 4 + w.size * 2

  kernel = functools.partial(
      _dense_block_kernel, N=N, H=H, W=W, C0=C0, growth=growth,
      num_layers=num_layers, lane_pad=lane_pad)

  out = pl.pallas_call(
      kernel,
      out_shape=jax.ShapeDtypeStruct((c_total, nhw), jnp.float32),
      in_specs=[pl.BlockSpec(memory_space=pltpu.MemorySpace.VMEM)]
      * len(flat_inputs),
      out_specs=pl.BlockSpec(memory_space=pltpu.MemorySpace.VMEM),
      scratch_shapes=[
          pltpu.VMEM((9 * growth, nhw + 2 * lane_pad), jnp.float32),  # taps
          pltpu.VMEM((cmax, 1), jnp.float32),   # cached per-channel means
          pltpu.VMEM((cmax, 1), jnp.float32),   # cached per-channel variances
      ],
      cost_estimate=pl.CostEstimate(
          flops=int(flops), transcendentals=int(cmax),
          bytes_accessed=int(bytes_accessed)),
  )(*flat_inputs)

  # (c_total, N*H*W) -> NCHW.
  return jnp.transpose(out.reshape(c_total, N, H, W), (1, 0, 2, 3))


def init_dense_block_params(key, in_channels, growth_rate, num_layers):
  """Synthetic params: conv weights ~ Kaiming normal (OIHW); BN affine is mildly
  randomized so the folded scale/shift path is actually exercised."""
  params = []
  for i in range(num_layers):
    cin = in_channels + i * growth_rate
    key, wk, gk, bk = jax.random.split(key, 4)
    fan_in = cin * 9
    w = jax.random.normal(wk, (growth_rate, cin, 3, 3), jnp.float32)
    w = w * jnp.sqrt(2.0 / fan_in)
    gamma = 1.0 + 0.1 * jax.random.normal(gk, (cin,), jnp.float32)
    beta = 0.1 * jax.random.normal(bk, (cin,), jnp.float32)
    params.append((gamma, beta, w))
  return params


def dense_block_reference(x, params):
  """Pure-JAX NCHW reference (training-mode BN, f32 HIGHEST conv)."""
  features = [x]
  for gamma, beta, w in params:
    inp = jnp.concatenate(features, axis=1)
    mean = jnp.mean(inp, axis=(0, 2, 3), keepdims=True)
    var = jnp.mean((inp - mean) ** 2, axis=(0, 2, 3), keepdims=True)
    y = (inp - mean) * lax.rsqrt(var + EPS)
    y = y * gamma.reshape(1, -1, 1, 1) + beta.reshape(1, -1, 1, 1)
    y = jnp.maximum(y, 0.0)
    out = lax.conv_general_dilated(
        y, w, window_strides=(1, 1), padding=((1, 1), (1, 1)),
        dimension_numbers=("NCHW", "OIHW", "NCHW"),
        precision=lax.Precision.HIGHEST)
    features.append(out)
  return jnp.concatenate(features, axis=1)


if __name__ == "__main__":
  in_channels, growth_rate, num_layers = 4, 4, 3
  N, H, W = 2, 16, 16

  key = jax.random.PRNGKey(0)
  kx, kp = jax.random.split(key)
  x = jax.random.normal(kx, (N, in_channels, H, W), jnp.float32)   # NCHW
  params = init_dense_block_params(kp, in_channels, growth_rate, num_layers)

  out = jax.block_until_ready(dense_block_forward(x, params))

  expected_channels = in_channels + num_layers * growth_rate
  assert out.shape == (N, expected_channels, H, W), out.shape

  ref = dense_block_reference(x, params)
  # bf16 MXU operands (f32 accumulation / elementwise) vs f32-HIGHEST reference.
  np.testing.assert_allclose(np.asarray(out), np.asarray(ref),
                             rtol=3e-2, atol=3e-2)
  print("KERNEL_OK")
</pallas_src>

<mosaic_0001>
module attributes {stable_mosaic.version = 11 : i64} {
  func.func @_dense_block_kernel(%arg0: memref<4x512xf32, #tpu.memory_space<vmem>>, %arg1: memref<9x512xf32, #tpu.memory_space<vmem>>, %arg2: memref<4x1xf32, #tpu.memory_space<vmem>>, %arg3: memref<4x1xf32, #tpu.memory_space<vmem>>, %arg4: memref<36x4xbf16, #tpu.memory_space<vmem>>, %arg5: memref<8x1xf32, #tpu.memory_space<vmem>>, %arg6: memref<8x1xf32, #tpu.memory_space<vmem>>, %arg7: memref<36x8xbf16, #tpu.memory_space<vmem>>, %arg8: memref<12x1xf32, #tpu.memory_space<vmem>>, %arg9: memref<12x1xf32, #tpu.memory_space<vmem>>, %arg10: memref<36x12xbf16, #tpu.memory_space<vmem>>, %arg11: memref<16x512xf32, #tpu.memory_space<vmem>>, %arg12: memref<36x768xf32, #tpu.memory_space<vmem>>, %arg13: memref<12x1xf32, #tpu.memory_space<vmem>>, %arg14: memref<12x1xf32, #tpu.memory_space<vmem>>) attributes {dimension_semantics = [], scalar_prefetch = 0 : i64, scratch_operands = 3 : i64, tpu.core_type = #tpu.core_type<tc>} {
    %cst = arith.constant 0.000000e+00 : f32
    %0 = vector.broadcast %cst : f32 to vector<36x768xf32>
    %c0 = arith.constant 0 : index
    %c0_0 = arith.constant 0 : index
    %1 = vector.load %arg12[%c0, %c0_0] : memref<36x768xf32, #tpu.memory_space<vmem>>, vector<36x768xf32>
    tpu.vector_store %arg12[%c0, %c0_0], %0 {strides = array<i32>} : memref<36x768xf32, #tpu.memory_space<vmem>>, vector<36x768xf32>,
    %c0_1 = arith.constant 0 : index
    %c0_2 = arith.constant 0 : index
    %2 = vector.load %arg0[%c0_1, %c0_2] : memref<4x512xf32, #tpu.memory_space<vmem>>, vector<4x512xf32>
    %c0_3 = arith.constant 0 : index
    %c0_4 = arith.constant 0 : index
    %3 = vector.load %arg11[%c0_3, %c0_4] : memref<16x512xf32, #tpu.memory_space<vmem>>, vector<4x512xf32>
    tpu.vector_store %arg11[%c0_3, %c0_4], %2 {strides = array<i32>} : memref<16x512xf32, #tpu.memory_space<vmem>>, vector<4x512xf32>,
    %cst_5 = arith.constant dense<0.000000e+00> : vector<4xf32>
    %4 = vector.multi_reduction <add>, %2, %cst_5 [1] : vector<4x512xf32> to vector<4xf32>
    %5 = vector.shape_cast %4 : vector<4xf32> to vector<4x1xf32>
    %cst_6 = arith.constant 0.001953125 : f32
    %6 = vector.broadcast %cst_6 : f32 to vector<4x1xf32>
    %7 = arith.mulf %5, %6 : vector<4x1xf32>
    %8 = arith.mulf %2, %2 : vector<4x512xf32>
    %cst_7 = arith.constant dense<0.000000e+00> : vector<4xf32>
    %9 = vector.multi_reduction <add>, %8, %cst_7 [1] : vector<4x512xf32> to vector<4xf32>
    %10 = vector.shape_cast %9 : vector<4xf32> to vector<4x1xf32>
    %cst_8 = arith.constant 0.001953125 : f32
    %11 = vector.broadcast %cst_8 : f32 to vector<4x1xf32>
    %12 = arith.mulf %10, %11 : vector<4x1xf32>
    %c0_9 = arith.constant 0 : index
    %c0_10 = arith.constant 0 : index
    %13 = vector.load %arg13[%c0_9, %c0_10] : memref<12x1xf32, #tpu.memory_space<vmem>>, vector<4x1xf32>
    tpu.vector_store %arg13[%c0_9, %c0_10], %7 {strides = array<i32>} : memref<12x1xf32, #tpu.memory_space<vmem>>, vector<4x1xf32>,
    %14 = arith.mulf %7, %7 : vector<4x1xf32>
    %15 = arith.subf %12, %14 : vector<4x1xf32>
    %cst_11 = arith.constant 0.000000e+00 : f32
    %16 = vector.broadcast %cst_11 : f32 to vector<4x1xf32>
    %17 = arith.maximumf %15, %16 : vector<4x1xf32>
    %c0_12 = arith.constant 0 : index
    %c0_13 = arith.constant 0 : index
    %18 = vector.load %arg14[%c0_12, %c0_13] : memref<12x1xf32, #tpu.memory_space<vmem>>, vector<4x1xf32>
    tpu.vector_store %arg14[%c0_12, %c0_13], %17 {strides = array<i32>} : memref<12x1xf32, #tpu.memory_space<vmem>>, vector<4x1xf32>,
    %c0_14 = arith.constant 0 : index
    %c0_15 = arith.constant 0 : index
    %19 = vector.load %arg2[%c0_14, %c0_15] : memref<4x1xf32, #tpu.memory_space<vmem>>, vector<4x1xf32>
    %c0_16 = arith.constant 0 : index
    %c0_17 = arith.constant 0 : index
    %20 = vector.load %arg3[%c0_16, %c0_17] : memref<4x1xf32, #tpu.memory_space<vmem>>, vector<4x1xf32>
    %c0_18 = arith.constant 0 : index
    %c0_19 = arith.constant 0 : index
    %21 = vector.load %arg4[%c0_18, %c0_19] : memref<36x4xbf16, #tpu.memory_space<vmem>>, vector<36x4xbf16>
    %c0_20 = arith.constant 0 : index
    %c0_21 = arith.constant 0 : index
    %22 = vector.load %arg14[%c0_20, %c0_21] : memref<12x1xf32, #tpu.memory_space<vmem>>, vector<4x1xf32>
    %cst_22 = arith.constant 9.99999974E-6 : f32
    %23 = vector.broadcast %cst_22 : f32 to vector<4x1xf32>
    %24 = arith.addf %22, %23 : vector<4x1xf32>
    %25 = math.rsqrt %24 : vector<4x1xf32>
    %26 = arith.mulf %19, %25 : vector<4x1xf32>
    %c0_23 = arith.constant 0 : index
    %c0_24 = arith.constant 0 : index
    %27 = vector.load %arg13[%c0_23, %c0_24] : memref<12x1xf32, #tpu.memory_space<vmem>>, vector<4x1xf32>
    %28 = arith.mulf %27, %26 : vector<4x1xf32>
    %29 = arith.subf %20, %28 : vector<4x1xf32>
    %c0_25 = arith.constant 0 : index
    %c0_26 = arith.constant 0 : index
    %30 = vector.load %arg11[%c0_25, %c0_26] : memref<16x512xf32, #tpu.memory_space<vmem>>, vector<4x512xf32>
    %31 = vector.broadcast %26 : vector<4x1xf32> to vector<4x512xf32>
    %32 = arith.mulf %30, %31 : vector<4x512xf32>
    %33 = vector.broadcast %29 : vector<4x1xf32> to vector<4x512xf32>
    %34 = arith.addf %32, %33 : vector<4x512xf32>
    %cst_27 = arith.constant 0.000000e+00 : f32
    %35 = vector.broadcast %cst_27 : f32 to vector<4x512xf32>
    %36 = arith.maximumf %34, %35 : vector<4x512xf32>
    %37 = arith.truncf %36 : vector<4x512xf32> to vector<4x512xbf16>
    %cst_28 = arith.constant dense<0.000000e+00> : vector<36x512xf32>
    %38 = tpu.matmul %21, %37, %cst_28 {dimension_numbers = #tpu.dot_dimension_numbers<[1], [0], [0], [1], [0, 0, 1, 1], [], []>} : vector<36x4xbf16>, vector<4x512xbf16>, vector<36x512xf32> -> vector<36x512xf32>
    %c0_29 = arith.constant 0 : index
    %c128 = arith.constant 128 : index
    %39 = vector.load %arg12[%c0_29, %c128] : memref<36x768xf32, #tpu.memory_space<vmem>>, vector<36x512xf32>
    tpu.vector_store %arg12[%c0_29, %c128], %38 {strides = array<i32>} : memref<36x768xf32, #tpu.memory_space<vmem>>, vector<36x512xf32>,
    %c16 = arith.constant 16 : index
    %c128_30 = arith.constant 128 : index
    %40 = vector.load %arg12[%c16, %c128_30] : memref<36x768xf32, #tpu.memory_space<vmem>>, vector<4x512xf32>
    %c0_31 = arith.constant 0 : index
    %c111 = arith.constant 111 : index
    %41 = vector.load %arg12[%c0_31, %c111] : memref<36x768xf32, #tpu.memory_space<vmem>>, vector<4x512xf32>
    %c0_32 = arith.constant 0 : index
    %c0_33 = arith.constant 0 : index
    %42 = vector.load %arg1[%c0_32, %c0_33] : memref<9x512xf32, #tpu.memory_space<vmem>>, vector<1x512xf32>
    %43 = vector.broadcast %42 : vector<1x512xf32> to vector<4x512xf32>
    %44 = arith.mulf %41, %43 : vector<4x512xf32>
    %45 = arith.addf %40, %44 : vector<4x512xf32>
    %c4 = arith.constant 4 : index
    %c112 = arith.constant 112 : index
    %46 = vector.load %arg12[%c4, %c112] : memref<36x768xf32, #tpu.memory_space<vmem>>, vector<4x512xf32>
    %c1 = arith.constant 1 : index
    %c0_34 = arith.constant 0 : index
    %47 = vector.load %arg1[%c1, %c0_34] : memref<9x512xf32, #tpu.memory_space<vmem>>, vector<1x512xf32>
    %48 = vector.broadcast %47 : vector<1x512xf32> to vector<4x512xf32>
    %49 = arith.mulf %46, %48 : vector<4x512xf32>
    %50 = arith.addf %45, %49 : vector<4x512xf32>
    %c8 = arith.constant 8 : index
    %c113 = arith.constant 113 : index
    %51 = vector.load %arg12[%c8, %c113] : memref<36x768xf32, #tpu.memory_space<vmem>>, vector<4x512xf32>
    %c2 = arith.constant 2 : index
    %c0_35 = arith.constant 0 : index
    %52 = vector.load %arg1[%c2, %c0_35] : memref<9x512xf32, #tpu.memory_space<vmem>>, vector<1x512xf32>
    %53 = vector.broadcast %52 : vector<1x512xf32> to vector<4x512xf32>
    %54 = arith.mulf %51, %53 : vector<4x512xf32>
    %55 = arith.addf %50, %54 : vector<4x512xf32>
    %c12 = arith.constant 12 : index
    %c127 = arith.constant 127 : index
    %56 = vector.load %arg12[%c12, %c127] : memref<36x768xf32, #tpu.memory_space<vmem>>, vector<4x512xf32>
    %c3 = arith.constant 3 : index
    %c0_36 = arith.constant 0 : index
    %57 = vector.load %arg1[%c3, %c0_36] : memref<9x512xf32, #tpu.memory_space<vmem>>, vector<1x512xf32>
    %58 = vector.broadcast %57 : vector<1x512xf32> to vector<4x512xf32>
    %59 = arith.mulf %56, %58 : vector<4x512xf32>
    %60 = arith.addf %55, %59 : vector<4x512xf32>
    %c20 = arith.constant 20 : index
    %c129 = arith.constant 129 : index
    %61 = vector.load %arg12[%c20, %c129] : memref<36x768xf32, #tpu.memory_space<vmem>>, vector<4x512xf32>
    %c5 = arith.constant 5 : index
    %c0_37 = arith.constant 0 : index
    %62 = vector.load %arg1[%c5, %c0_37] : memref<9x512xf32, #tpu.memory_space<vmem>>, vector<1x512xf32>
    %63 = vector.broadcast %62 : vector<1x512xf32> to vector<4x512xf32>
    %64 = arith.mulf %61, %63 : vector<4x512xf32>
    %65 = arith.addf %60, %64 : vector<4x512xf32>
    %c24 = arith.constant 24 : index
    %c143 = arith.constant 143 : index
    %66 = vector.load %arg12[%c24, %c143] : memref<36x768xf32, #tpu.memory_space<vmem>>, vector<4x512xf32>
    %c6 = arith.constant 6 : index
    %c0_38 = arith.constant 0 : index
    %67 = vector.load %arg1[%c6, %c0_38] : memref<9x512xf32, #tpu.memory_space<vmem>>, vector<1x512xf32>
    %68 = vector.broadcast %67 : vector<1x512xf32> to vector<4x512xf32>
    %69 = arith.mulf %66, %68 : vector<4x512xf32>
    %70 = arith.addf %65, %69 : vector<4x512xf32>
    %c28 = arith.constant 28 : index
    %c144 = arith.constant 144 : index
    %71 = vector.load %arg12[%c28, %c144] : memref<36x768xf32, #tpu.memory_space<vmem>>, vector<4x512xf32>
    %c7 = arith.constant 7 : index
    %c0_39 = arith.constant 0 : index
    %72 = vector.load %arg1[%c7, %c0_39] : memref<9x512xf32, #tpu.memory_space<vmem>>, vector<1x512xf32>
    %73 = vector.broadcast %72 : vector<1x512xf32> to vector<4x512xf32>
    %74 = arith.mulf %71, %73 : vector<4x512xf32>
    %75 = arith.addf %70, %74 : vector<4x512xf32>
    %c32 = arith.constant 32 : index
    %c145 = arith.constant 145 : index
    %76 = vector.load %arg12[%c32, %c145] : memref<36x768xf32, #tpu.memory_space<vmem>>, vector<4x512xf32>
    %c8_40 = arith.constant 8 : index
    %c0_41 = arith.constant 0 : index
    %77 = vector.load %arg1[%c8_40, %c0_41] : memref<9x512xf32, #tpu.memory_space<vmem>>, vector<1x512xf32>
    %78 = vector.broadcast %77 : vector<1x512xf32> to vector<4x512xf32>
    %79 = arith.mulf %76, %78 : vector<4x512xf32>
    %80 = arith.addf %75, %79 : vector<4x512xf32>
    %c4_42 = arith.constant 4 : index
    %c0_43 = arith.constant 0 : index
    %81 = vector.load %arg11[%c4_42, %c0_43] : memref<16x512xf32, #tpu.memory_space<vmem>>, vector<4x512xf32>
    tpu.vector_store %arg11[%c4_42, %c0_43], %80 {strides = array<i32>} : memref<16x512xf32, #tpu.memory_space<vmem>>, vector<4x512xf32>,
    %cst_44 = arith.constant dense<0.000000e+00> : vector<4xf32>
    %82 = vector.multi_reduction <add>, %80, %cst_44 [1] : vector<4x512xf32> to vector<4xf32>
    %83 = vector.shape_cast %82 : vector<4xf32> to vector<4x1xf32>
    %cst_45 = arith.constant 0.001953125 : f32
    %84 = vector.broadcast %cst_45 : f32 to vector<4x1xf32>
    %85 = arith.mulf %83, %84 : vector<4x1xf32>
    %86 = arith.mulf %80, %80 : vector<4x512xf32>
    %cst_46 = arith.constant dense<0.000000e+00> : vector<4xf32>
    %87 = vector.multi_reduction <add>, %86, %cst_46 [1] : vector<4x512xf32> to vector<4xf32>
    %88 = vector.shape_cast %87 : vector<4xf32> to vector<4x1xf32>
    %cst_47 = arith.constant 0.001953125 : f32
    %89 = vector.broadcast %cst_47 : f32 to vector<4x1xf32>
    %90 = arith.mulf %88, %89 : vector<4x1xf32>
    %c4_48 = arith.constant 4 : index
    %c0_49 = arith.constant 0 : index
    %91 = vector.load %arg13[%c4_48, %c0_49] : memref<12x1xf32, #tpu.memory_space<vmem>>, vector<4x1xf32>
    tpu.vector_store %arg13[%c4_48, %c0_49], %85 {strides = array<i32>} : memref<12x1xf32, #tpu.memory_space<vmem>>, vector<4x1xf32>,
    %92 = arith.mulf %85, %85 : vector<4x1xf32>
    %93 = arith.subf %90, %92 : vector<4x1xf32>
    %cst_50 = arith.constant 0.000000e+00 : f32
    %94 = vector.broadcast %cst_50 : f32 to vector<4x1xf32>
    %95 = arith.maximumf %93, %94 : vector<4x1xf32>
    %c4_51 = arith.constant 4 : index
    %c0_52 = arith.constant 0 : index
    %96 = vector.load %arg14[%c4_51, %c0_52] : memref<12x1xf32, #tpu.memory_space<vmem>>, vector<4x1xf32>
    tpu.vector_store %arg14[%c4_51, %c0_52], %95 {strides = array<i32>} : memref<12x1xf32, #tpu.memory_space<vmem>>, vector<4x1xf32>,
    %c0_53 = arith.constant 0 : index
    %c0_54 = arith.constant 0 : index
    %97 = vector.load %arg5[%c0_53, %c0_54] : memref<8x1xf32, #tpu.memory_space<vmem>>, vector<8x1xf32>
    %c0_55 = arith.constant 0 : index
    %c0_56 = arith.constant 0 : index
    %98 = vector.load %arg6[%c0_55, %c0_56] : memref<8x1xf32, #tpu.memory_space<vmem>>, vector<8x1xf32>
    %c0_57 = arith.constant 0 : index
    %c0_58 = arith.constant 0 : index
    %99 = vector.load %arg7[%c0_57, %c0_58] : memref<36x8xbf16, #tpu.memory_space<vmem>>, vector<36x8xbf16>
    %c0_59 = arith.constant 0 : index
    %c0_60 = arith.constant 0 : index
    %100 = vector.load %arg14[%c0_59, %c0_60] : memref<12x1xf32, #tpu.memory_space<vmem>>, vector<8x1xf32>
    %cst_61 = arith.constant 9.99999974E-6 : f32
    %101 = vector.broadcast %cst_61 : f32 to vector<8x1xf32>
    %102 = arith.addf %100, %101 : vector<8x1xf32>
    %103 = math.rsqrt %102 : vector<8x1xf32>
    %104 = arith.mulf %97, %103 : vector<8x1xf32>
    %c0_62 = arith.constant 0 : index
    %c0_63 = arith.constant 0 : index
    %105 = vector.load %arg13[%c0_62, %c0_63] : memref<12x1xf32, #tpu.memory_space<vmem>>, vector<8x1xf32>
    %106 = arith.mulf %105, %104 : vector<8x1xf32>
    %107 = arith.subf %98, %106 : vector<8x1xf32>
    %c0_64 = arith.constant 0 : index
    %c0_65 = arith.constant 0 : index
    %108 = vector.load %arg11[%c0_64, %c0_65] : memref<16x512xf32, #tpu.memory_space<vmem>>, vector<8x512xf32>
    %109 = vector.broadcast %104 : vector<8x1xf32> to vector<8x512xf32>
    %110 = arith.mulf %108, %109 : vector<8x512xf32>
    %111 = vector.broadcast %107 : vector<8x1xf32> to vector<8x512xf32>
    %112 = arith.addf %110, %111 : vector<8x512xf32>
    %cst_66 = arith.constant 0.000000e+00 : f32
    %113 = vector.broadcast %cst_66 : f32 to vector<8x512xf32>
    %114 = arith.maximumf %112, %113 : vector<8x512xf32>
    %115 = arith.truncf %114 : vector<8x512xf32> to vector<8x512xbf16>
    %cst_67 = arith.constant dense<0.000000e+00> : vector<36x512xf32>
    %116 = tpu.matmul %99, %115, %cst_67 {dimension_numbers = #tpu.dot_dimension_numbers<[1], [0], [0], [1], [0, 0, 1, 1], [], []>} : vector<36x8xbf16>, vector<8x512xbf16>, vector<36x512xf32> -> vector<36x512xf32>
    %c0_68 = arith.constant 0 : index
    %c128_69 = arith.constant 128 : index
    %117 = vector.load %arg12[%c0_68, %c128_69] : memref<36x768xf32, #tpu.memory_space<vmem>>, vector<36x512xf32>
    tpu.vector_store %arg12[%c0_68, %c128_69], %116 {strides = array<i32>} : memref<36x768xf32, #tpu.memory_space<vmem>>, vector<36x512xf32>,
    %c16_70 = arith.constant 16 : index
    %c128_71 = arith.constant 128 : index
    %118 = vector.load %arg12[%c16_70, %c128_71] : memref<36x768xf32, #tpu.memory_space<vmem>>, vector<4x512xf32>
    %c0_72 = arith.constant 0 : index
    %c111_73 = arith.constant 111 : index
    %119 = vector.load %arg12[%c0_72, %c111_73] : memref<36x768xf32, #tpu.memory_space<vmem>>, vector<4x512xf32>
    %c0_74 = arith.constant 0 : index
    %c0_75 = arith.constant 0 : index
    %120 = vector.load %arg1[%c0_74, %c0_75] : memref<9x512xf32, #tpu.memory_space<vmem>>, vector<1x512xf32>
    %121 = vector.broadcast %120 : vector<1x512xf32> to vector<4x512xf32>
    %122 = arith.mulf %119, %121 : vector<4x512xf32>
    %123 = arith.addf %118, %122 : vector<4x512xf32>
    %c4_76 = arith.constant 4 : index
    %c112_77 = arith.constant 112 : index
    %124 = vector.load %arg12[%c4_76, %c112_77] : memref<36x768xf32, #tpu.memory_space<vmem>>, vector<4x512xf32>
    %c1_78 = arith.constant 1 : index
    %c0_79 = arith.constant 0 : index
    %125 = vector.load %arg1[%c1_78, %c0_79] : memref<9x512xf32, #tpu.memory_space<vmem>>, vector<1x512xf32>
    %126 = vector.broadcast %125 : vector<1x512xf32> to vector<4x512xf32>
    %127 = arith.mulf %124, %126 : vector<4x512xf32>
    %128 = arith.addf %123, %127 : vector<4x512xf32>
    %c8_80 = arith.constant 8 : index
    %c113_81 = arith.constant 113 : index
    %129 = vector.load %arg12[%c8_80, %c113_81] : memref<36x768xf32, #tpu.memory_space<vmem>>, vector<4x512xf32>
    %c2_82 = arith.constant 2 : index
    %c0_83 = arith.constant 0 : index
    %130 = vector.load %arg1[%c2_82, %c0_83] : memref<9x512xf32, #tpu.memory_space<vmem>>, vector<1x512xf32>
    %131 = vector.broadcast %130 : vector<1x512xf32> to vector<4x512xf32>
    %132 = arith.mulf %129, %131 : vector<4x512xf32>
    %133 = arith.addf %128, %132 : vector<4x512xf32>
    %c12_84 = arith.constant 12 : index
    %c127_85 = arith.constant 127 : index
    %134 = vector.load %arg12[%c12_84, %c127_85] : memref<36x768xf32, #tpu.memory_space<vmem>>, vector<4x512xf32>
    %c3_86 = arith.constant 3 : index
    %c0_87 = arith.constant 0 : index
    %135 = vector.load %arg1[%c3_86, %c0_87] : memref<9x512xf32, #tpu.memory_space<vmem>>, vector<1x512xf32>
    %136 = vector.broadcast %135 : vector<1x512xf32> to vector<4x512xf32>
    %137 = arith.mulf %134, %136 : vector<4x512xf32>
    %138 = arith.addf %133, %137 : vector<4x512xf32>
    %c20_88 = arith.constant 20 : index
    %c129_89 = arith.constant 129 : index
    %139 = vector.load %arg12[%c20_88, %c129_89] : memref<36x768xf32, #tpu.memory_space<vmem>>, vector<4x512xf32>
    %c5_90 = arith.constant 5 : index
    %c0_91 = arith.constant 0 : index
    %140 = vector.load %arg1[%c5_90, %c0_91] : memref<9x512xf32, #tpu.memory_space<vmem>>, vector<1x512xf32>
    %141 = vector.broadcast %140 : vector<1x512xf32> to vector<4x512xf32>
    %142 = arith.mulf %139, %141 : vector<4x512xf32>
    %143 = arith.addf %138, %142 : vector<4x512xf32>
    %c24_92 = arith.constant 24 : index
    %c143_93 = arith.constant 143 : index
    %144 = vector.load %arg12[%c24_92, %c143_93] : memref<36x768xf32, #tpu.memory_space<vmem>>, vector<4x512xf32>
    %c6_94 = arith.constant 6 : index
    %c0_95 = arith.constant 0 : index
    %145 = vector.load %arg1[%c6_94, %c0_95] : memref<9x512xf32, #tpu.memory_space<vmem>>, vector<1x512xf32>
    %146 = vector.broadcast %145 : vector<1x512xf32> to vector<4x512xf32>
    %147 = arith.mulf %144, %146 : vector<4x512xf32>
    %148 = arith.addf %143, %147 : vector<4x512xf32>
    %c28_96 = arith.constant 28 : index
    %c144_97 = arith.constant 144 : index
    %149 = vector.load %arg12[%c28_96, %c144_97] : memref<36x768xf32, #tpu.memory_space<vmem>>, vector<4x512xf32>
    %c7_98 = arith.constant 7 : index
    %c0_99 = arith.constant 0 : index
    %150 = vector.load %arg1[%c7_98, %c0_99] : memref<9x512xf32, #tpu.memory_space<vmem>>, vector<1x512xf32>
    %151 = vector.broadcast %150 : vector<1x512xf32> to vector<4x512xf32>
    %152 = arith.mulf %149, %151 : vector<4x512xf32>
    %153 = arith.addf %148, %152 : vector<4x512xf32>
    %c32_100 = arith.constant 32 : index
    %c145_101 = arith.constant 145 : index
    %154 = vector.load %arg12[%c32_100, %c145_101] : memref<36x768xf32, #tpu.memory_space<vmem>>, vector<4x512xf32>
    %c8_102 = arith.constant 8 : index
    %c0_103 = arith.constant 0 : index
    %155 = vector.load %arg1[%c8_102, %c0_103] : memref<9x512xf32, #tpu.memory_space<vmem>>, vector<1x512xf32>
    %156 = vector.broadcast %155 : vector<1x512xf32> to vector<4x512xf32>
    %157 = arith.mulf %154, %156 : vector<4x512xf32>
    %158 = arith.addf %153, %157 : vector<4x512xf32>
    %c8_104 = arith.constant 8 : index
    %c0_105 = arith.constant 0 : index
    %159 = vector.load %arg11[%c8_104, %c0_105] : memref<16x512xf32, #tpu.memory_space<vmem>>, vector<4x512xf32>
    tpu.vector_store %arg11[%c8_104, %c0_105], %158 {strides = array<i32>} : memref<16x512xf32, #tpu.memory_space<vmem>>, vector<4x512xf32>,
    %cst_106 = arith.constant dense<0.000000e+00> : vector<4xf32>
    %160 = vector.multi_reduction <add>, %158, %cst_106 [1] : vector<4x512xf32> to vector<4xf32>
    %161 = vector.shape_cast %160 : vector<4xf32> to vector<4x1xf32>
    %cst_107 = arith.constant 0.001953125 : f32
    %162 = vector.broadcast %cst_107 : f32 to vector<4x1xf32>
    %163 = arith.mulf %161, %162 : vector<4x1xf32>
    %164 = arith.mulf %158, %158 : vector<4x512xf32>
    %cst_108 = arith.constant dense<0.000000e+00> : vector<4xf32>
    %165 = vector.multi_reduction <add>, %164, %cst_108 [1] : vector<4x512xf32> to vector<4xf32>
    %166 = vector.shape_cast %165 : vector<4xf32> to vector<4x1xf32>
    %cst_109 = arith.constant 0.001953125 : f32
    %167 = vector.broadcast %cst_109 : f32 to vector<4x1xf32>
    %168 = arith.mulf %166, %167 : vector<4x1xf32>
    %c8_110 = arith.constant 8 : index
    %c0_111 = arith.constant 0 : index
    %169 = vector.load %arg13[%c8_110, %c0_111] : memref<12x1xf32, #tpu.memory_space<vmem>>, vector<4x1xf32>
    tpu.vector_store %arg13[%c8_110, %c0_111], %163 {strides = array<i32>} : memref<12x1xf32, #tpu.memory_space<vmem>>, vector<4x1xf32>,
    %170 = arith.mulf %163, %163 : vector<4x1xf32>
    %171 = arith.subf %168, %170 : vector<4x1xf32>
    %cst_112 = arith.constant 0.000000e+00 : f32
    %172 = vector.broadcast %cst_112 : f32 to vector<4x1xf32>
    %173 = arith.maximumf %171, %172 : vector<4x1xf32>
    %c8_113 = arith.constant 8 : index
    %c0_114 = arith.constant 0 : index
    %174 = vector.load %arg14[%c8_113, %c0_114] : memref<12x1xf32, #tpu.memory_space<vmem>>, vector<4x1xf32>
    tpu.vector_store %arg14[%c8_113, %c0_114], %173 {strides = array<i32>} : memref<12x1xf32, #tpu.memory_space<vmem>>, vector<4x1xf32>,
    %c0_115 = arith.constant 0 : index
    %c0_116 = arith.constant 0 : index
    %175 = vector.load %arg8[%c0_115, %c0_116] : memref<12x1xf32, #tpu.memory_space<vmem>>, vector<12x1xf32>
    %c0_117 = arith.constant 0 : index
    %c0_118 = arith.constant 0 : index
    %176 = vector.load %arg9[%c0_117, %c0_118] : memref<12x1xf32, #tpu.memory_space<vmem>>, vector<12x1xf32>
    %c0_119 = arith.constant 0 : index
    %c0_120 = arith.constant 0 : index
    %177 = vector.load %arg10[%c0_119, %c0_120] : memref<36x12xbf16, #tpu.memory_space<vmem>>, vector<36x12xbf16>
    %c0_121 = arith.constant 0 : index
    %c0_122 = arith.constant 0 : index
    %178 = vector.load %arg14[%c0_121, %c0_122] : memref<12x1xf32, #tpu.memory_space<vmem>>, vector<12x1xf32>
    %cst_123 = arith.constant 9.99999974E-6 : f32
    %179 = vector.broadcast %cst_123 : f32 to vector<12x1xf32>
    %180 = arith.addf %178, %179 : vector<12x1xf32>
    %181 = math.rsqrt %180 : vector<12x1xf32>
    %182 = arith.mulf %175, %181 : vector<12x1xf32>
    %c0_124 = arith.constant 0 : index
    %c0_125 = arith.constant 0 : index
    %183 = vector.load %arg13[%c0_124, %c0_125] : memref<12x1xf32, #tpu.memory_space<vmem>>, vector<12x1xf32>
    %184 = arith.mulf %183, %182 : vector<12x1xf32>
    %185 = arith.subf %176, %184 : vector<12x1xf32>
    %c0_126 = arith.constant 0 : index
    %c0_127 = arith.constant 0 : index
    %186 = vector.load %arg11[%c0_126, %c0_127] : memref<16x512xf32, #tpu.memory_space<vmem>>, vector<12x512xf32>
    %187 = vector.broadcast %182 : vector<12x1xf32> to vector<12x512xf32>
    %188 = arith.mulf %186, %187 : vector<12x512xf32>
    %189 = vector.broadcast %185 : vector<12x1xf32> to vector<12x512xf32>
    %190 = arith.addf %188, %189 : vector<12x512xf32>
    %cst_128 = arith.constant 0.000000e+00 : f32
    %191 = vector.broadcast %cst_128 : f32 to vector<12x512xf32>
    %192 = arith.maximumf %190, %191 : vector<12x512xf32>
    %193 = arith.truncf %192 : vector<12x512xf32> to vector<12x512xbf16>
    %cst_129 = arith.constant dense<0.000000e+00> : vector<36x512xf32>
    %194 = tpu.matmul %177, %193, %cst_129 {dimension_numbers = #tpu.dot_dimension_numbers<[1], [0], [0], [1], [0, 0, 1, 1], [], []>} : vector<36x12xbf16>, vector<12x512xbf16>, vector<36x512xf32> -> vector<36x512xf32>
    %c0_130 = arith.constant 0 : index
    %c128_131 = arith.constant 128 : index
    %195 = vector.load %arg12[%c0_130, %c128_131] : memref<36x768xf32, #tpu.memory_space<vmem>>, vector<36x512xf32>
    tpu.vector_store %arg12[%c0_130, %c128_131], %194 {strides = array<i32>} : memref<36x768xf32, #tpu.memory_space<vmem>>, vector<36x512xf32>,
    %c16_132 = arith.constant 16 : index
    %c128_133 = arith.constant 128 : index
    %196 = vector.load %arg12[%c16_132, %c128_133] : memref<36x768xf32, #tpu.memory_space<vmem>>, vector<4x512xf32>
    %c0_134 = arith.constant 0 : index
    %c111_135 = arith.constant 111 : index
    %197 = vector.load %arg12[%c0_134, %c111_135] : memref<36x768xf32, #tpu.memory_space<vmem>>, vector<4x512xf32>
    %c0_136 = arith.constant 0 : index
    %c0_137 = arith.constant 0 : index
    %198 = vector.load %arg1[%c0_136, %c0_137] : memref<9x512xf32, #tpu.memory_space<vmem>>, vector<1x512xf32>
    %199 = vector.broadcast %198 : vector<1x512xf32> to vector<4x512xf32>
    %200 = arith.mulf %197, %199 : vector<4x512xf32>
    %201 = arith.addf %196, %200 : vector<4x512xf32>
    %c4_138 = arith.constant 4 : index
    %c112_139 = arith.constant 112 : index
    %202 = vector.load %arg12[%c4_138, %c112_139] : memref<36x768xf32, #tpu.memory_space<vmem>>, vector<4x512xf32>
    %c1_140 = arith.constant 1 : index
    %c0_141 = arith.constant 0 : index
    %203 = vector.load %arg1[%c1_140, %c0_141] : memref<9x512xf32, #tpu.memory_space<vmem>>, vector<1x512xf32>
    %204 = vector.broadcast %203 : vector<1x512xf32> to vector<4x512xf32>
    %205 = arith.mulf %202, %204 : vector<4x512xf32>
    %206 = arith.addf %201, %205 : vector<4x512xf32>
    %c8_142 = arith.constant 8 : index
    %c113_143 = arith.constant 113 : index
    %207 = vector.load %arg12[%c8_142, %c113_143] : memref<36x768xf32, #tpu.memory_space<vmem>>, vector<4x512xf32>
    %c2_144 = arith.constant 2 : index
    %c0_145 = arith.constant 0 : index
    %208 = vector.load %arg1[%c2_144, %c0_145] : memref<9x512xf32, #tpu.memory_space<vmem>>, vector<1x512xf32>
    %209 = vector.broadcast %208 : vector<1x512xf32> to vector<4x512xf32>
    %210 = arith.mulf %207, %209 : vector<4x512xf32>
    %211 = arith.addf %206, %210 : vector<4x512xf32>
    %c12_146 = arith.constant 12 : index
    %c127_147 = arith.constant 127 : index
    %212 = vector.load %arg12[%c12_146, %c127_147] : memref<36x768xf32, #tpu.memory_space<vmem>>, vector<4x512xf32>
    %c3_148 = arith.constant 3 : index
    %c0_149 = arith.constant 0 : index
    %213 = vector.load %arg1[%c3_148, %c0_149] : memref<9x512xf32, #tpu.memory_space<vmem>>, vector<1x512xf32>
    %214 = vector.broadcast %213 : vector<1x512xf32> to vector<4x512xf32>
    %215 = arith.mulf %212, %214 : vector<4x512xf32>
    %216 = arith.addf %211, %215 : vector<4x512xf32>
    %c20_150 = arith.constant 20 : index
    %c129_151 = arith.constant 129 : index
    %217 = vector.load %arg12[%c20_150, %c129_151] : memref<36x768xf32, #tpu.memory_space<vmem>>, vector<4x512xf32>
    %c5_152 = arith.constant 5 : index
    %c0_153 = arith.constant 0 : index
    %218 = vector.load %arg1[%c5_152, %c0_153] : memref<9x512xf32, #tpu.memory_space<vmem>>, vector<1x512xf32>
    %219 = vector.broadcast %218 : vector<1x512xf32> to vector<4x512xf32>
    %220 = arith.mulf %217, %219 : vector<4x512xf32>
    %221 = arith.addf %216, %220 : vector<4x512xf32>
    %c24_154 = arith.constant 24 : index
    %c143_155 = arith.constant 143 : index
    %222 = vector.load %arg12[%c24_154, %c143_155] : memref<36x768xf32, #tpu.memory_space<vmem>>, vector<4x512xf32>
    %c6_156 = arith.constant 6 : index
    %c0_157 = arith.constant 0 : index
    %223 = vector.load %arg1[%c6_156, %c0_157] : memref<9x512xf32, #tpu.memory_space<vmem>>, vector<1x512xf32>
    %224 = vector.broadcast %223 : vector<1x512xf32> to vector<4x512xf32>
    %225 = arith.mulf %222, %224 : vector<4x512xf32>
    %226 = arith.addf %221, %225 : vector<4x512xf32>
    %c28_158 = arith.constant 28 : index
    %c144_159 = arith.constant 144 : index
    %227 = vector.load %arg12[%c28_158, %c144_159] : memref<36x768xf32, #tpu.memory_space<vmem>>, vector<4x512xf32>
    %c7_160 = arith.constant 7 : index
    %c0_161 = arith.constant 0 : index
    %228 = vector.load %arg1[%c7_160, %c0_161] : memref<9x512xf32, #tpu.memory_space<vmem>>, vector<1x512xf32>
    %229 = vector.broadcast %228 : vector<1x512xf32> to vector<4x512xf32>
    %230 = arith.mulf %227, %229 : vector<4x512xf32>
    %231 = arith.addf %226, %230 : vector<4x512xf32>
    %c32_162 = arith.constant 32 : index
    %c145_163 = arith.constant 145 : index
    %232 = vector.load %arg12[%c32_162, %c145_163] : memref<36x768xf32, #tpu.memory_space<vmem>>, vector<4x512xf32>
    %c8_164 = arith.constant 8 : index
    %c0_165 = arith.constant 0 : index
    %233 = vector.load %arg1[%c8_164, %c0_165] : memref<9x512xf32, #tpu.memory_space<vmem>>, vector<1x512xf32>
    %234 = vector.broadcast %233 : vector<1x512xf32> to vector<4x512xf32>
    %235 = arith.mulf %232, %234 : vector<4x512xf32>
    %236 = arith.addf %231, %235 : vector<4x512xf32>
    %c12_166 = arith.constant 12 : index
    %c0_167 = arith.constant 0 : index
    %237 = vector.load %arg11[%c12_166, %c0_167] : memref<16x512xf32, #tpu.memory_space<vmem>>, vector<4x512xf32>
    tpu.vector_store %arg11[%c12_166, %c0_167], %236 {strides = array<i32>} : memref<16x512xf32, #tpu.memory_space<vmem>>, vector<4x512xf32>,
    return
  }
}

</mosaic_0001>

<llo_original>
// kernel: tpu_custom_call.1
$region0: #{tpu_custom_call.1}
  #allocation0 [shape = 'u32[]', space=smem, size = 0x4, offset = 0x4, fixed_abs, tag = 'smem constant byte address 0x4 - core index']
  #allocation1 [shape = 'u32[72,128]{1,0:T(1,128)}', space=vmem, size = 0x9000, scoped, tag = 'internal scratch']
  #allocation2 [shape = 'f32[36,768]{1,0:T(8,128)}', space=vmem, size = 0x1e000, scoped, tag = 'scratch operand']
  #allocation3 [shape = 'f32[12,1]{1,0:T(8,128)}', space=vmem, size = 0x2000, scoped, tag = 'scratch operand']
  #allocation4 [shape = 'f32[12,1]{1,0:T(8,128)}', space=vmem, size = 0x2000, scoped, tag = 'scratch operand']
  %s0 = inlined_call_operand.vmem [shape: f32[4,512], index: 0, kind: input, shape index: {}]
  %s1 = inlined_call_operand.vmem [shape: f32[9,512], index: 1, kind: input, shape index: {}]
  %s2 = inlined_call_operand.vmem [shape: f32[4,1], index: 2, kind: input, shape index: {}]
  %s3 = inlined_call_operand.vmem [shape: f32[4,1], index: 3, kind: input, shape index: {}]
  %s4 = inlined_call_operand.vmem [shape: bf16[36,4], index: 4, kind: input, shape index: {}]
  %s5 = inlined_call_operand.vmem [shape: f32[8,1], index: 5, kind: input, shape index: {}]
  %s6 = inlined_call_operand.vmem [shape: f32[8,1], index: 6, kind: input, shape index: {}]
  %s7 = inlined_call_operand.vmem [shape: bf16[36,8], index: 7, kind: input, shape index: {}]
  %s8 = inlined_call_operand.vmem [shape: f32[12,1], index: 8, kind: input, shape index: {}]
  %s9 = inlined_call_operand.vmem [shape: f32[12,1], index: 9, kind: input, shape index: {}]
  %s10 = inlined_call_operand.vmem [shape: bf16[36,12], index: 10, kind: input, shape index: {}]
  %s11 = inlined_call_operand.hbm [shape: f32[16,512], index: 11, kind: output, shape index: {}]
  %s12 = sld [smem:[#allocation0]]
  $region54: #{tpu_custom_call.1} parent=0
    _
  %s14 = ssub.s32 1, %s12
  %s15 = scalar_select 0, %s14, %s12
  $region1: #{tpu_custom_call.1} parent=0
    #allocation5 [shape = 'u8[32768]{0}', space=vmem, size = 0x8000, scoped, tag = 'output window, operand 0, single buffered']
    #allocation6 [shape = 's32[1]{0}', space=sflag, size = 0x4, scoped, tag = 'scoped memory for tpu_custom_call.1']
    %16 = vsyncpa [#allocation6], 0
    // Predicated region
    $region2: #{tpu_custom_call.1} parent=1 // pred_check
      _
    $region3: #{tpu_custom_call.1} parent=1 // pred_check_branch
      %18 = sbr.rel (0) target = $region5
    $region4: #{tpu_custom_call.1} parent=1 // pred_region
      _
    $region5: #{tpu_custom_call.1} parent=1 // pred_fallthru
      _
    // Predicated region
    $region6: #{tpu_custom_call.1} parent=1 // pred_check
      _
    $region7: #{tpu_custom_call.1} parent=1 // pred_check_branch
      %20 = sbr.rel (0) target = $region9
    $region8: #{tpu_custom_call.1} parent=1 // pred_region
      _
    $region9: #{tpu_custom_call.1} parent=1 // pred_fallthru
      _
    // Predicated region
    $region10: #{tpu_custom_call.1} parent=1 // pred_check
      _
    $region11: #{tpu_custom_call.1} parent=1 // pred_check_branch
      %22 = sbr.rel (0) target = $region13
    $region12: #{tpu_custom_call.1} parent=1 // pred_region
      _
    $region13: #{tpu_custom_call.1} parent=1 // pred_fallthru
      _
    // Predicated region
    $region14: #{tpu_custom_call.1} parent=1 // pred_check
      _
    $region15: #{tpu_custom_call.1} parent=1 // pred_check_branch
      %24 = sbr.rel (0) target = $region17
    $region16: #{tpu_custom_call.1} parent=1 // pred_region
      _
    $region17: #{tpu_custom_call.1} parent=1 // pred_fallthru
      _
    // Predicated region
    $region18: #{tpu_custom_call.1} parent=1 // pred_check
      _
    $region19: #{tpu_custom_call.1} parent=1 // pred_check_branch
      %26 = sbr.rel (0) target = $region21
    $region20: #{tpu_custom_call.1} parent=1 // pred_region
      _
    $region21: #{tpu_custom_call.1} parent=1 // pred_fallthru
      _
    // Predicated region
    $region22: #{tpu_custom_call.1} parent=1 // pred_check
      _
    $region23: #{tpu_custom_call.1} parent=1 // pred_check_branch
      %28 = sbr.rel (0) target = $region25
    $region24: #{tpu_custom_call.1} parent=1 // pred_region
      _
    $region25: #{tpu_custom_call.1} parent=1 // pred_fallthru
      _
    // Predicated region
    $region26: #{tpu_custom_call.1} parent=1 // pred_check
      _
    $region27: #{tpu_custom_call.1} parent=1 // pred_check_branch
      %30 = sbr.rel (0) target = $region29
    $region28: #{tpu_custom_call.1} parent=1 // pred_region
      _
    $region29: #{tpu_custom_call.1} parent=1 // pred_fallthru
      _
    // Predicated region
    $region30: #{tpu_custom_call.1} parent=1 // pred_check
      _
    $region31: #{tpu_custom_call.1} parent=1 // pred_check_branch
      %32 = sbr.rel (0) target = $region33
    $region32: #{tpu_custom_call.1} parent=1 // pred_region
      _
    $region33: #{tpu_custom_call.1} parent=1 // pred_fallthru
      _
    // Predicated region
    $region34: #{tpu_custom_call.1} parent=1 // pred_check
      _
    $region35: #{tpu_custom_call.1} parent=1 // pred_check_branch
      %34 = sbr.rel (0) target = $region37
    $region36: #{tpu_custom_call.1} parent=1 // pred_region
      _
    $region37: #{tpu_custom_call.1} parent=1 // pred_fallthru
      _
    // Predicated region
    $region38: #{tpu_custom_call.1} parent=1 // pred_check
      _
    $region39: #{tpu_custom_call.1} parent=1 // pred_check_branch
      %36 = sbr.rel (0) target = $region41
    $region40: #{tpu_custom_call.1} parent=1 // pred_region
      _
    $region41: #{tpu_custom_call.1} parent=1 // pred_fallthru
      _
    // Predicated region
    $region42: #{tpu_custom_call.1} parent=1 // pred_check
      _
    $region43: #{tpu_custom_call.1} parent=1 // pred_check_branch
      %38 = sbr.rel (0) target = $region45
    $region44: #{tpu_custom_call.1} parent=1 // pred_region
      _
    $region45: #{tpu_custom_call.1} parent=1 // pred_fallthru
      _
    %40 = vst [vmem:[#allocation2] sm:$0xff] 0.0
    %41 = vst [vmem:[#allocation2 + $0x8] sm:$0xff] 0.0
    %42 = vst [vmem:[#allocation2 + $0x10] sm:$0xff] 0.0
    %43 = vst [vmem:[#allocation2 + $0x18] sm:$0xff] 0.0
    %44 = vst [vmem:[#allocation2 + $0x20] sm:$0xff] 0.0
    %45 = vst [vmem:[#allocation2 + $0x28] sm:$0xff] 0.0
    %46 = vst [vmem:[#allocation2 + $0x30] sm:$0xff] 0.0
    %47 = vst [vmem:[#allocation2 + $0x38] sm:$0xff] 0.0
    %48 = vst [vmem:[#allocation2 + $0x40] sm:$0xff] 0.0
    %49 = vst [vmem:[#allocation2 + $0x48] sm:$0xff] 0.0
    %50 = vst [vmem:[#allocation2 + $0x50] sm:$0xff] 0.0
    %51 = vst [vmem:[#allocation2 + $0x58] sm:$0xff] 0.0
    %52 = vst [vmem:[#allocation2 + $0x60] sm:$0xff] 0.0
    %53 = vst [vmem:[#allocation2 + $0x68] sm:$0xff] 0.0
    %54 = vst [vmem:[#allocation2 + $0x70] sm:$0xff] 0.0
    %55 = vst [vmem:[#allocation2 + $0x78] sm:$0xff] 0.0
    %56 = vst [vmem:[#allocation2 + $0x80] sm:$0xff] 0.0
    %57 = vst [vmem:[#allocation2 + $0x88] sm:$0xff] 0.0
    %58 = vst [vmem:[#allocation2 + $0x90] sm:$0xff] 0.0
    %59 = vst [vmem:[#allocation2 + $0x98] sm:$0xff] 0.0
    %60 = vst [vmem:[#allocation2 + $0xa0] sm:$0xff] 0.0
    %61 = vst [vmem:[#allocation2 + $0xa8] sm:$0xff] 0.0
    %62 = vst [vmem:[#allocation2 + $0xb0] sm:$0xff] 0.0
    %63 = vst [vmem:[#allocation2 + $0xb8] sm:$0xff] 0.0
    %64 = vst [vmem:[#allocation2 + $0xc0] sm:$0xf] 0.0
    %65 = vst [vmem:[#allocation2 + $0xc8] sm:$0xf] 0.0
    %66 = vst [vmem:[#allocation2 + $0xd0] sm:$0xf] 0.0
    %67 = vst [vmem:[#allocation2 + $0xd8] sm:$0xf] 0.0
    %68 = vst [vmem:[#allocation2 + $0xe0] sm:$0xf] 0.0
    %69 = vst [vmem:[#allocation2 + $0xe8] sm:$0xf] 0.0
    %v70 = vld [vmem:[%s0] sm:$0xff]
    %v71 = vld [vmem:[%s0 + $0x8] sm:$0xff]
    %74 = vst [vmem:[#allocation1] ss:$2 sm:$0xff] %v70
    %s75 = scalar_lea.vmem [#allocation1], 16
    %76 = vst [vmem:[%s75] ss:$2 sm:$0xff] %v71
    %v77 = vld.sshfl [vmem:[#allocation1] sm:$0xff pattern:$0x75316420]
    %v78 = vld.sshfl [vmem:[#allocation1 + $0x8] sm:$0xff pattern:$0x75316420]
    %v79 = vld.sshfl [vmem:[#allocation1 + $0x10] sm:$0xff pattern:$0x75316420]
    %v80 = vld.sshfl [vmem:[#allocation1 + $0x18] sm:$0xff pattern:$0x75316420]
    %85 = vst [vmem:[#allocation5] sm:$0xf] %v77
    %86 = vst [vmem:[#allocation5 + $0x8] sm:$0xf] %v78
    %87 = vst [vmem:[#allocation5 + $0x10] sm:$0xf] %v79
    %88 = vst [vmem:[#allocation5 + $0x18] sm:$0xf] %v80
    %89 = vst [vmem:[#allocation1] ss:$2 sm:$0xff] %v70
    %s90 = scalar_lea.vmem [#allocation1], 16
    %91 = vst [vmem:[%s90] ss:$2 sm:$0xff] %v71
    %v92 = vld.sshfl [vmem:[#allocation1] sm:$0xff pattern:$0x75316420]
    %v93 = vld.sshfl [vmem:[#allocation1 + $0x8] sm:$0xff pattern:$0x75316420]
    %v94 = vld.sshfl [vmem:[#allocation1 + $0x10] sm:$0xff pattern:$0x75316420]
    %v95 = vld.sshfl [vmem:[#allocation1 + $0x18] sm:$0xff pattern:$0x75316420]
    %vm100 = vcmask 1043456
    %v101 = vsel %vm100, %v92, 0.0
    %v102 = vsel %vm100, %v93, 0.0
    %v103 = vadd.f32 %v101, %v102
    %v104 = vsel %vm100, %v94, 0.0
    %v105 = vadd.f32 %v103, %v104
    %v106 = vsel %vm100, %v95, 0.0
    %v107 = vadd.f32 %v105, %v106
    %108 = vadd.xlane.f32.xlu0 %v107
    %v109 = vpop.xlane.xlu0 %108
    %v110 = vmul.f32 %v109, 0.001953125
    %v111 = vmul.f32 %v70, %v70
    %v112 = vmul.f32 %v71, %v71
    %115 = vst [vmem:[#allocation1] ss:$2 sm:$0xff] %v111
    %s116 = scalar_lea.vmem [#allocation1], 16
    %117 = vst [vmem:[%s116] ss:$2 sm:$0xff] %v112
    %v118 = vld.sshfl [vmem:[#allocation1] sm:$0xff pattern:$0x75316420]
    %v119 = vld.sshfl [vmem:[#allocation1 + $0x8] sm:$0xff pattern:$0x75316420]
    %v120 = vld.sshfl [vmem:[#allocation1 + $0x10] sm:$0xff pattern:$0x75316420]
    %v121 = vld.sshfl [vmem:[#allocation1 + $0x18] sm:$0xff pattern:$0x75316420]
    %v126 = vsel %vm100, %v118, 0.0
    %v127 = vsel %vm100, %v119, 0.0
    %v128 = vadd.f32 %v126, %v127
    %v129 = vsel %vm100, %v120, 0.0
    %v130 = vadd.f32 %v128, %v129
    %v131 = vsel %vm100, %v121, 0.0
    %v132 = vadd.f32 %v130, %v131
    %133 = vadd.xlane.f32.xlu0 %v132
    %v134 = vpop.xlane.xlu0 %133
    %v135 = vmul.f32 %v134, 0.001953125
    %vm136 = vcmask 3072
    %137 = vst.msk [vmem:[#allocation3] sm:$0xf] %vm136, %v110
    %v138 = vmul.f32 %v110, %v110
    %v139 = vsub.f32 %v135, %v138
    %v140 = vmax.f32 %v139, 0.0
    %141 = vst.msk [vmem:[#allocation4] sm:$0xf] %vm136, %v140
    %v142 = vld [vmem:[%s2] sm:$0xf]
    %v143 = vld [vmem:[%s3] sm:$0xf]
    %v144 = vld [vmem:[%s4] sm:$0xf]
    %v145 = vld [vmem:[%s4 + $0x4] sm:$0xf]
    %v146 = vld [vmem:[%s4 + $0x8] sm:$0xf]
    %v147 = vld [vmem:[%s4 + $0xc] sm:$0xf]
    %v148 = vld [vmem:[%s4 + $0x10] sm:$0x3]
    %v149 = vld [vmem:[#allocation4] sm:$0xf]
    %v150 = vadd.f32 %v149, 1e-05
    %v151 = vrsqrt.pop %v150
    %v152 = vmul.f32 %v151, %v150
    %v153 = vmul.f32 %v152, %v151
    %v154 = vmul.f32 0.5, %v153
    %v155 = vsub.f32 1.5, %v154
    %v156 = vmul.f32 %v151, %v155
    %vm157 = vweird.f32 %v150
    %vm158 = vweird.f32 %v151
    %vm159 = vmor %vm157, %vm158
    %v160 = vsel %vm159, %v151, %v156
    %v161 = vmul.f32 %v142, %v160
    %v162 = vld [vmem:[#allocation3] sm:$0xf]
    %v163 = vmul.f32 %v162, %v161
    %v164 = vsub.f32 %v143, %v163
    %v165 = vld [vmem:[#allocation5] sm:$0xf]
    %v166 = vld [vmem:[#allocation5 + $0x8] sm:$0xf]
    %v167 = vld [vmem:[#allocation5 + $0x10] sm:$0xf]
    %v168 = vld [vmem:[#allocation5 + $0x18] sm:$0xf]
    %170 = vset.pattern.permute.xlu0 0
    %171 = vperm.xlu0 %170, %v161
    %v172 = vpop.permute.xlu0 %171
    %v174 = vmul.f32 %v165, %v172
    %v175 = vmul.f32 %v166, %v172
    %v176 = vmul.f32 %v167, %v172
    %v177 = vmul.f32 %v168, %v172
    %179 = vset.pattern.permute.xlu0 0
    %180 = vperm.xlu0 %179, %v164
    %v181 = vpop.permute.xlu0 %180
    %v183 = vadd.f32 %v174, %v181
    %v184 = vadd.f32 %v175, %v181
    %v185 = vadd.f32 %v176, %v181
    %v186 = vadd.f32 %v177, %v181
    %v187 = vmax.f32 %v183, 0.0
    %v188 = vmax.f32 %v184, 0.0
    %v189 = vmax.f32 %v185, 0.0
    %v190 = vmax.f32 %v186, 0.0
    %v191 = vpack.c.bf16 %v187, %v187
    %v192 = vpack.c.bf16 %v188, %v188
    %v193 = vpack.c.bf16 %v189, %v189
    %v194 = vpack.c.bf16 %v190, %v190
    %v200 = vunpack.c.l.b16 %v144
    %v201 = vunpack.c.l.b16 %v145
    %v202 = vunpack.c.l.b16 %v146
    %v203 = vunpack.c.l.b16 %v147
    %v204 = vunpack.c.l.b16 %v148
    %v205 = vpack.c.b16 %v201, %v200
    %v206 = vpack.c.b16 %v203, %v202
    %v207 = vpack.c.b16 %v204, %v204
    %vm208 = vcmask 31744
    %v210 = vsel %vm208, %v205, 0
    %v213 = vsel %vm208, %v206, 0
    %v216 = vsel %vm208, %v207, 0
    %vm218 = vcmask 1041408
    %v220 = vsel %vm218, %v191, 0
    %v223 = vsel %vm218, %v192, 0
    %v226 = vsel %vm218, %v193, 0
    %v229 = vsel %vm218, %v194, 0
    %231 = vmatpush.bf16.msra.mxu0 0
    %232 = vmatpush.bf16.msra.mxu0 0
    %233 = vmatpush.bf16.msra.mxu0 0
    %234 = vmatpush.bf16.msra.mxu0 0
    %235 = vmatpush.bf16.msra.mxu0 0
    %236 = vmatpush.bf16.msra.mxu0 0
    %237 = vmatpush.bf16.msra.mxu0 0
    %238 = vmatpush.bf16.msra.mxu0 %v220
    %239 = vmatmul.bf16.gmra.mxu0 %v210
    %v240 = vpop.f32.mrf.mxu0
    %v241 = vadd.f32 0.0, %v240
    %v242 = vpop.f32.mrf.mxu0
    %v243 = vadd.f32 0.0, %v242
    %244 = vmatmul.bf16.gmra.mxu0 %v213
    %v245 = vpop.f32.mrf.mxu0
    %v246 = vadd.f32 0.0, %v245
    %v247 = vpop.f32.mrf.mxu0
    %v248 = vadd.f32 0.0, %v247
    %249 = vmatmul.bf16.gmra.mxu0 %v216
    %v250 = vpop.f32.mrf.mxu0
    %v251 = vadd.f32 0.0, %v250
    %v252 = vpop.f32.mrf.mxu0
    %253 = vdwg.mxu0
    %254 = vmatpush.bf16.msra.mxu0 0
    %255 = vmatpush.bf16.msra.mxu0 0
    %256 = vmatpush.bf16.msra.mxu0 0
    %257 = vmatpush.bf16.msra.mxu0 0
    %258 = vmatpush.bf16.msra.mxu0 0
    %259 = vmatpush.bf16.msra.mxu0 0
    %260 = vmatpush.bf16.msra.mxu0 0
    %261 = vmatpush.bf16.msra.mxu0 %v223
    %262 = vmatmul.bf16.gmra.mxu0 %v210
    %v263 = vpop.f32.mrf.mxu0
    %v264 = vadd.f32 0.0, %v263
    %v265 = vpop.f32.mrf.mxu0
    %v266 = vadd.f32 0.0, %v265
    %267 = vmatmul.bf16.gmra.mxu0 %v213
    %v268 = vpop.f32.mrf.mxu0
    %v269 = vadd.f32 0.0, %v268
    %v270 = vpop.f32.mrf.mxu0
    %v271 = vadd.f32 0.0, %v270
    %272 = vmatmul.bf16.gmra.mxu0 %v216
    %v273 = vpop.f32.mrf.mxu0
    %v274 = vadd.f32 0.0, %v273
    %v275 = vpop.f32.mrf.mxu0
    %276 = vdwg.mxu0
    %277 = vmatpush.bf16.msra.mxu0 0
    %278 = vmatpush.bf16.msra.mxu0 0
    %279 = vmatpush.bf16.msra.mxu0 0
    %280 = vmatpush.bf16.msra.mxu0 0
    %281 = vmatpush.bf16.msra.mxu0 0
    %282 = vmatpush.bf16.msra.mxu0 0
    %283 = vmatpush.bf16.msra.mxu0 0
    %284 = vmatpush.bf16.msra.mxu0 %v226
    %285 = vmatmul.bf16.gmra.mxu0 %v210
    %v286 = vpop.f32.mrf.mxu0
    %v287 = vadd.f32 0.0, %v286
    %v288 = vpop.f32.mrf.mxu0
    %v289 = vadd.f32 0.0, %v288
    %290 = vmatmul.bf16.gmra.mxu0 %v213
    %v291 = vpop.f32.mrf.mxu0
    %v292 = vadd.f32 0.0, %v291
    %v293 = vpop.f32.mrf.mxu0
    %v294 = vadd.f32 0.0, %v293
    %295 = vmatmul.bf16.gmra.mxu0 %v216
    %v296 = vpop.f32.mrf.mxu0
    %v297 = vadd.f32 0.0, %v296
    %v298 = vpop.f32.mrf.mxu0
    %299 = vdwg.mxu0
    %300 = vmatpush.bf16.msra.mxu0 0
    %301 = vmatpush.bf16.msra.mxu0 0
    %302 = vmatpush.bf16.msra.mxu0 0
    %303 = vmatpush.bf16.msra.mxu0 0
    %304 = vmatpush.bf16.msra.mxu0 0
    %305 = vmatpush.bf16.msra.mxu0 0
    %306 = vmatpush.bf16.msra.mxu0 0
    %307 = vmatpush.bf16.msra.mxu0 %v229
    %308 = vmatmul.bf16.gmra.mxu0 %v210
    %v309 = vpop.f32.mrf.mxu0
    %v310 = vadd.f32 0.0, %v309
    %v311 = vpop.f32.mrf.mxu0
    %v312 = vadd.f32 0.0, %v311
    %313 = vmatmul.bf16.gmra.mxu0 %v213
    %v314 = vpop.f32.mrf.mxu0
    %v315 = vadd.f32 0.0, %v314
    %v316 = vpop.f32.mrf.mxu0
    %v317 = vadd.f32 0.0, %v316
    %318 = vmatmul.bf16.gmra.mxu0 %v216
    %v319 = vpop.f32.mrf.mxu0
    %v320 = vadd.f32 0.0, %v319
    %v321 = vpop.f32.mrf.mxu0
    %322 = vdwg.mxu0
    %323 = vst [vmem:[#allocation2 + $0x8] sm:$0xff] %v241
    %324 = vst [vmem:[#allocation2 + $0x10] sm:$0xff] %v264
    %325 = vst [vmem:[#allocation2 + $0x18] sm:$0xff] %v287
    %326 = vst [vmem:[#allocation2 + $0x20] sm:$0xff] %v310
    %327 = vst [vmem:[#allocation2 + $0x38] sm:$0xff] %v243
    %328 = vst [vmem:[#allocation2 + $0x40] sm:$0xff] %v266
    %329 = vst [vmem:[#allocation2 + $0x48] sm:$0xff] %v289
    %330 = vst [vmem:[#allocation2 + $0x50] sm:$0xff] %v312
    %331 = vst [vmem:[#allocation2 + $0x68] sm:$0xff] %v246
    %332 = vst [vmem:[#allocation2 + $0x70] sm:$0xff] %v269
    %333 = vst [vmem:[#allocation2 + $0x78] sm:$0xff] %v292
    %334 = vst [vmem:[#allocation2 + $0x80] sm:$0xff] %v315
    %335 = vst [vmem:[#allocation2 + $0x98] sm:$0xff] %v248
    %336 = vst [vmem:[#allocation2 + $0xa0] sm:$0xff] %v271
    %337 = vst [vmem:[#allocation2 + $0xa8] sm:$0xff] %v294
    %338 = vst [vmem:[#allocation2 + $0xb0] sm:$0xff] %v317
    %339 = vst [vmem:[#allocation2 + $0xc8] sm:$0xf] %v251
    %340 = vst [vmem:[#allocation2 + $0xd0] sm:$0xf] %v274
    %341 = vst [vmem:[#allocation2 + $0xd8] sm:$0xf] %v297
    %342 = vst [vmem:[#allocation2 + $0xe0] sm:$0xf] %v320
    %v343 = vld [vmem:[#allocation2 + $0x68] sm:$0xf]
    %v344 = vld [vmem:[#allocation2 + $0x70] sm:$0xf]
    %v345 = vld [vmem:[#allocation2 + $0x78] sm:$0xf]
    %v346 = vld [vmem:[#allocation2 + $0x80] sm:$0xf]
    %v347 = vld [vmem:[#allocation2] sm:$0xf]
    %v348 = vld [vmem:[#allocation2 + $0x8] sm:$0xf]
    %v349 = vld [vmem:[#allocation2 + $0x10] sm:$0xf]
    %v350 = vld [vmem:[#allocation2 + $0x18] sm:$0xf]
    %v351 = vld [vmem:[#allocation2 + $0x20] sm:$0xf]
    %v352 = vld [vmem:[%s1] ss:$8 sm:$0xf]
    %v354 = vperm.slane %v352, 0
    %v355 = vperm.slane %v352, 1
    %v356 = vperm.slane %v352, 2
    %v357 = vperm.slane %v352, 3
    %358 = vrot.lane.b32.xlu0 %v354, 111
    %v359 = vpop.permute.xlu0 %358
    %360 = vrot.lane.b32.xlu0 %v355, 111
    %v361 = vpop.permute.xlu0 %360
    %362 = vrot.lane.b32.xlu0 %v356, 111
    %v363 = vpop.permute.xlu0 %362
    %364 = vrot.lane.b32.xlu0 %v357, 111
    %v365 = vpop.permute.xlu0 %364
    %vm366 = vcmask 908288
    %v367 = vsel %vm366, %v359, %v361
    %v368 = vsel %vm366, %v361, %v363
    %v369 = vsel %vm366, %v363, %v365
    %v375 = vmul.f32 %v347, %v359
    %v376 = vmul.f32 %v348, %v367
    %v377 = vmul.f32 %v349, %v368
    %v378 = vmul.f32 %v350, %v369
    %v379 = vmul.f32 %v351, %v365
    %385 = vrot.lane.b32.xlu0 %v375, 17
    %v386 = vpop.permute.xlu0 %385
    %387 = vrot.lane.b32.xlu0 %v376, 17
    %v388 = vpop.permute.xlu0 %387
    %389 = vrot.lane.b32.xlu0 %v377, 17
    %v390 = vpop.permute.xlu0 %389
    %391 = vrot.lane.b32.xlu0 %v378, 17
    %v392 = vpop.permute.xlu0 %391
    %393 = vrot.lane.b32.xlu0 %v379, 17
    %v394 = vpop.permute.xlu0 %393
    %vm395 = vcmask 138240
    %v396 = vsel %vm395, %v386, %v388
    %v397 = vsel %vm395, %v388, %v390
    %v398 = vsel %vm395, %v390, %v392
    %v399 = vsel %vm395, %v392, %v394
    %v404 = vadd.f32 %v343, %v396
    %v405 = vadd.f32 %v344, %v397
    %v406 = vadd.f32 %v345, %v398
    %v407 = vadd.f32 %v346, %v399
    %v408 = vld [vmem:[#allocation2] sm:$0xf0]
    %v409 = vld [vmem:[#allocation2 + $0x8] sm:$0xf0]
    %v410 = vld [vmem:[#allocation2 + $0x10] sm:$0xf0]
    %v411 = vld [vmem:[#allocation2 + $0x18] sm:$0xf0]
    %v412 = vld [vmem:[#allocation2 + $0x20] sm:$0xf0]
    %s413 = scalar_lea.vmem %s1, 1
    %v414 = vld [vmem:[%s413] ss:$8 sm:$0xf]
    %v416 = vperm.slane %v414, 0
    %v417 = vperm.slane %v414, 1
    %v418 = vperm.slane %v414, 2
    %v419 = vperm.slane %v414, 3
    %420 = vrot.lane.b32.xlu0 %v416, 112
    %v421 = vpop.permute.xlu0 %420
    %422 = vrot.lane.b32.xlu0 %v417, 112
    %v423 = vpop.permute.xlu0 %422
    %424 = vrot.lane.b32.xlu0 %v418, 112
    %v425 = vpop.permute.xlu0 %424
    %426 = vrot.lane.b32.xlu0 %v419, 112
    %v427 = vpop.permute.xlu0 %426
    %vm428 = vcmask 916480
    %v429 = vsel %vm428, %v421, %v423
    %v430 = vsel %vm428, %v423, %v425
    %v431 = vsel %vm428, %v425, %v427
    %v437 = vmul.f32 %v408, %v421
    %v438 = vmul.f32 %v409, %v429
    %v439 = vmul.f32 %v410, %v430
    %v440 = vmul.f32 %v411, %v431
    %v441 = vmul.f32 %v412, %v427
    %v447 = vrot.slane %v437, 4
    %v448 = vrot.slane %v438, 4
    %v449 = vrot.slane %v439, 4
    %v450 = vrot.slane %v440, 4
    %v451 = vrot.slane %v441, 4
    %452 = vrot.lane.b32.xlu0 %v447, 16
    %v453 = vpop.permute.xlu0 %452
    %454 = vrot.lane.b32.xlu0 %v448, 16
    %v455 = vpop.permute.xlu0 %454
    %456 = vrot.lane.b32.xlu0 %v449, 16
    %v457 = vpop.permute.xlu0 %456
    %458 = vrot.lane.b32.xlu0 %v450, 16
    %v459 = vpop.permute.xlu0 %458
    %460 = vrot.lane.b32.xlu0 %v451, 16
    %v461 = vpop.permute.xlu0 %460
    %vm462 = vcmask 130048
    %v463 = vsel %vm462, %v453, %v455
    %v464 = vsel %vm462, %v455, %v457
    %v465 = vsel %vm462, %v457, %v459
    %v466 = vsel %vm462, %v459, %v461
    %v471 = vadd.f32 %v404, %v463
    %v472 = vadd.f32 %v405, %v464
    %v473 = vadd.f32 %v406, %v465
    %v474 = vadd.f32 %v407, %v466
    %v475 = vld [vmem:[#allocation2 + $0x30] sm:$0xf]
    %v476 = vld [vmem:[#allocation2 + $0x38] sm:$0xf]
    %v477 = vld [vmem:[#allocation2 + $0x40] sm:$0xf]
    %v478 = vld [vmem:[#allocation2 + $0x48] sm:$0xf]
    %v479 = vld [vmem:[#allocation2 + $0x50] sm:$0xf]
    %s480 = scalar_lea.vmem %s1, 2
    %v481 = vld [vmem:[%s480] ss:$8 sm:$0xf]
    %v483 = vperm.slane %v481, 0
    %v484 = vperm.slane %v481, 1
    %v485 = vperm.slane %v481, 2
    %v486 = vperm.slane %v481, 3
    %487 = vrot.lane.b32.xlu0 %v483, 113
    %v488 = vpop.permute.xlu0 %487
    %489 = vrot.lane.b32.xlu0 %v484, 113
    %v490 = vpop.permute.xlu0 %489
    %491 = vrot.lane.b32.xlu0 %v485, 113
    %v492 = vpop.permute.xlu0 %491
    %493 = vrot.lane.b32.xlu0 %v486, 113
    %v494 = vpop.permute.xlu0 %493
    %vm495 = vcmask 924672
    %v496 = vsel %vm495, %v488, %v490
    %v497 = vsel %vm495, %v490, %v492
    %v498 = vsel %vm495, %v492, %v494
    %v504 = vmul.f32 %v475, %v488
    %v505 = vmul.f32 %v476, %v496
    %v506 = vmul.f32 %v477, %v497
    %v507 = vmul.f32 %v478, %v498
    %v508 = vmul.f32 %v479, %v494
    %514 = vrot.lane.b32.xlu0 %v504, 15
    %v515 = vpop.permute.xlu0 %514
    %516 = vrot.lane.b32.xlu0 %v505, 15
    %v517 = vpop.permute.xlu0 %516
    %518 = vrot.lane.b32.xlu0 %v506, 15
    %v519 = vpop.permute.xlu0 %518
    %520 = vrot.lane.b32.xlu0 %v507, 15
    %v521 = vpop.permute.xlu0 %520
    %522 = vrot.lane.b32.xlu0 %v508, 15
    %v523 = vpop.permute.xlu0 %522
    %vm524 = vcmask 121856
    %v525 = vsel %vm524, %v515, %v517
    %v526 = vsel %vm524, %v517, %v519
    %v527 = vsel %vm524, %v519, %v521
    %v528 = vsel %vm524, %v521, %v523
    %v533 = vadd.f32 %v471, %v525
    %v534 = vadd.f32 %v472, %v526
    %v535 = vadd.f32 %v473, %v527
    %v536 = vadd.f32 %v474, %v528
    %v537 = vld [vmem:[#allocation2 + $0x30] sm:$0xf0]
    %v538 = vld [vmem:[#allocation2 + $0x38] sm:$0xf0]
    %v539 = vld [vmem:[#allocation2 + $0x40] sm:$0xf0]
    %v540 = vld [vmem:[#allocation2 + $0x48] sm:$0xf0]
    %v541 = vld [vmem:[#allocation2 + $0x50] sm:$0xf0]
    %s542 = scalar_lea.vmem %s1, 3
    %v543 = vld [vmem:[%s542] ss:$8 sm:$0xf]
    %v545 = vperm.slane %v543, 0
    %v546 = vperm.slane %v543, 1
    %v547 = vperm.slane %v543, 2
    %v548 = vperm.slane %v543, 3
    %549 = vrot.lane.b32.xlu0 %v545, 127
    %v550 = vpop.permute.xlu0 %549
    %551 = vrot.lane.b32.xlu0 %v546, 127
    %v552 = vpop.permute.xlu0 %551
    %553 = vrot.lane.b32.xlu0 %v547, 127
    %v554 = vpop.permute.xlu0 %553
    %555 = vrot.lane.b32.xlu0 %v548, 127
    %v556 = vpop.permute.xlu0 %555
    %vm557 = vcmask 1039360
    %v558 = vsel %vm557, %v550, %v552
    %v559 = vsel %vm557, %v552, %v554
    %v560 = vsel %vm557, %v554, %v556
    %v566 = vmul.f32 %v537, %v550
    %v567 = vmul.f32 %v538, %v558
    %v568 = vmul.f32 %v539, %v559
    %v569 = vmul.f32 %v540, %v560
    %v570 = vmul.f32 %v541, %v556
    %v576 = vrot.slane %v566, 4
    %v577 = vrot.slane %v567, 4
    %v578 = vrot.slane %v568, 4
    %v579 = vrot.slane %v569, 4
    %v580 = vrot.slane %v570, 4
    %581 = vrot.lane.b32.xlu0 %v576, 1
    %v582 = vpop.permute.xlu0 %581
    %583 = vrot.lane.b32.xlu0 %v577, 1
    %v584 = vpop.permute.xlu0 %583
    %585 = vrot.lane.b32.xlu0 %v578, 1
    %v586 = vpop.permute.xlu0 %585
    %587 = vrot.lane.b32.xlu0 %v579, 1
    %v588 = vpop.permute.xlu0 %587
    %589 = vrot.lane.b32.xlu0 %v580, 1
    %v590 = vpop.permute.xlu0 %589
    %vm591 = vcmask 7168
    %v592 = vsel %vm591, %v582, %v584
    %v593 = vsel %vm591, %v584, %v586
    %v594 = vsel %vm591, %v586, %v588
    %v595 = vsel %vm591, %v588, %v590
    %v600 = vadd.f32 %v533, %v592
    %v601 = vadd.f32 %v534, %v593
    %v602 = vadd.f32 %v535, %v594
    %v603 = vadd.f32 %v536, %v595
    %v604 = vld [vmem:[#allocation2 + $0x68] sm:$0xf0]
    %v605 = vld [vmem:[#allocation2 + $0x70] sm:$0xf0]
    %v606 = vld [vmem:[#allocation2 + $0x78] sm:$0xf0]
    %v607 = vld [vmem:[#allocation2 + $0x80] sm:$0xf0]
    %v608 = vld [vmem:[#allocation2 + $0x88] sm:$0xf0]
    %s609 = scalar_lea.vmem %s1, 5
    %v610 = vld [vmem:[%s609] ss:$8 sm:$0xf]
    %v612 = vperm.slane %v610, 0
    %v613 = vperm.slane %v610, 1
    %v614 = vperm.slane %v610, 2
    %v615 = vperm.slane %v610, 3
    %616 = vrot.lane.b32.xlu0 %v612, 1
    %v617 = vpop.permute.xlu0 %616
    %618 = vrot.lane.b32.xlu0 %v613, 1
    %v619 = vpop.permute.xlu0 %618
    %620 = vrot.lane.b32.xlu0 %v614, 1
    %v621 = vpop.permute.xlu0 %620
    %622 = vrot.lane.b32.xlu0 %v615, 1
    %v623 = vpop.permute.xlu0 %622
    %v624 = vsel %vm591, %v617, %v619
    %v625 = vsel %vm591, %v619, %v621
    %v626 = vsel %vm591, %v621, %v623
    %v632 = vmul.f32 %v604, %v617
    %v633 = vmul.f32 %v605, %v624
    %v634 = vmul.f32 %v606, %v625
    %v635 = vmul.f32 %v607, %v626
    %v636 = vmul.f32 %v608, %v623
    %v642 = vrot.slane %v632, 4
    %v643 = vrot.slane %v633, 4
    %v644 = vrot.slane %v634, 4
    %v645 = vrot.slane %v635, 4
    %v646 = vrot.slane %v636, 4
    %647 = vrot.lane.b32.xlu0 %v642, 127
    %v648 = vpop.permute.xlu0 %647
    %649 = vrot.lane.b32.xlu0 %v643, 127
    %v650 = vpop.permute.xlu0 %649
    %651 = vrot.lane.b32.xlu0 %v644, 127
    %v652 = vpop.permute.xlu0 %651
    %653 = vrot.lane.b32.xlu0 %v645, 127
    %v654 = vpop.permute.xlu0 %653
    %655 = vrot.lane.b32.xlu0 %v646, 127
    %v656 = vpop.permute.xlu0 %655
    %v657 = vsel %vm557, %v648, %v650
    %v658 = vsel %vm557, %v650, %v652
    %v659 = vsel %vm557, %v652, %v654
    %v660 = vsel %vm557, %v654, %v656
    %v665 = vadd.f32 %v600, %v657
    %v666 = vadd.f32 %v601, %v658
    %v667 = vadd.f32 %v602, %v659
    %v668 = vadd.f32 %v603, %v660
    %v669 = vld [vmem:[#allocation2 + $0x98] sm:$0xf]
    %v670 = vld [vmem:[#allocation2 + $0xa0] sm:$0xf]
    %v671 = vld [vmem:[#allocation2 + $0xa8] sm:$0xf]
    %v672 = vld [vmem:[#allocation2 + $0xb0] sm:$0xf]
    %v673 = vld [vmem:[#allocation2 + $0xb8] sm:$0xf]
    %s674 = scalar_lea.vmem %s1, 6
    %v675 = vld [vmem:[%s674] ss:$8 sm:$0xf]
    %v677 = vperm.slane %v675, 0
    %v678 = vperm.slane %v675, 1
    %v679 = vperm.slane %v675, 2
    %v680 = vperm.slane %v675, 3
    %681 = vrot.lane.b32.xlu0 %v677, 15
    %v682 = vpop.permute.xlu0 %681
    %683 = vrot.lane.b32.xlu0 %v678, 15
    %v684 = vpop.permute.xlu0 %683
    %685 = vrot.lane.b32.xlu0 %v679, 15
    %v686 = vpop.permute.xlu0 %685
    %687 = vrot.lane.b32.xlu0 %v680, 15
    %v688 = vpop.permute.xlu0 %687
    %v689 = vsel %vm524, %v682, %v684
    %v690 = vsel %vm524, %v684, %v686
    %v691 = vsel %vm524, %v686, %v688
    %v697 = vmul.f32 %v669, %v682
    %v698 = vmul.f32 %v670, %v689
    %v699 = vmul.f32 %v671, %v690
    %v700 = vmul.f32 %v672, %v691
    %v701 = vmul.f32 %v673, %v688
    %707 = vrot.lane.b32.xlu0 %v697, 113
    %v708 = vpop.permute.xlu0 %707
    %709 = vrot.lane.b32.xlu0 %v698, 113
    %v710 = vpop.permute.xlu0 %709
    %711 = vrot.lane.b32.xlu0 %v699, 113
    %v712 = vpop.permute.xlu0 %711
    %713 = vrot.lane.b32.xlu0 %v700, 113
    %v714 = vpop.permute.xlu0 %713
    %715 = vrot.lane.b32.xlu0 %v701, 113
    %v716 = vpop.permute.xlu0 %715
    %v717 = vsel %vm495, %v708, %v710
    %v718 = vsel %vm495, %v710, %v712
    %v719 = vsel %vm495, %v712, %v714
    %v720 = vsel %vm495, %v714, %v716
    %v725 = vadd.f32 %v665, %v717
    %v726 = vadd.f32 %v666, %v718
    %v727 = vadd.f32 %v667, %v719
    %v728 = vadd.f32 %v668, %v720
    %v729 = vld [vmem:[#allocation2 + $0x98] sm:$0xf0]
    %v730 = vld [vmem:[#allocation2 + $0xa0] sm:$0xf0]
    %v731 = vld [vmem:[#allocation2 + $0xa8] sm:$0xf0]
    %v732 = vld [vmem:[#allocation2 + $0xb0] sm:$0xf0]
    %v733 = vld [vmem:[#allocation2 + $0xb8] sm:$0xf0]
    %s734 = scalar_lea.vmem %s1, 7
    %v735 = vld [vmem:[%s734] ss:$8 sm:$0xf]
    %v737 = vperm.slane %v735, 0
    %v738 = vperm.slane %v735, 1
    %v739 = vperm.slane %v735, 2
    %v740 = vperm.slane %v735, 3
    %741 = vrot.lane.b32.xlu0 %v737, 16
    %v742 = vpop.permute.xlu0 %741
    %743 = vrot.lane.b32.xlu0 %v738, 16
    %v744 = vpop.permute.xlu0 %743
    %745 = vrot.lane.b32.xlu0 %v739, 16
    %v746 = vpop.permute.xlu0 %745
    %747 = vrot.lane.b32.xlu0 %v740, 16
    %v748 = vpop.permute.xlu0 %747
    %v749 = vsel %vm462, %v742, %v744
    %v750 = vsel %vm462, %v744, %v746
    %v751 = vsel %vm462, %v746, %v748
    %v757 = vmul.f32 %v729, %v742
    %v758 = vmul.f32 %v730, %v749
    %v759 = vmul.f32 %v731, %v750
    %v760 = vmul.f32 %v732, %v751
    %v761 = vmul.f32 %v733, %v748
    %v767 = vrot.slane %v757, 4
    %v768 = vrot.slane %v758, 4
    %v769 = vrot.slane %v759, 4
    %v770 = vrot.slane %v760, 4
    %v771 = vrot.slane %v761, 4
    %772 = vrot.lane.b32.xlu0 %v767, 112
    %v773 = vpop.permute.xlu0 %772
    %774 = vrot.lane.b32.xlu0 %v768, 112
    %v775 = vpop.permute.xlu0 %774
    %776 = vrot.lane.b32.xlu0 %v769, 112
    %v777 = vpop.permute.xlu0 %776
    %778 = vrot.lane.b32.xlu0 %v770, 112
    %v779 = vpop.permute.xlu0 %778
    %780 = vrot.lane.b32.xlu0 %v771, 112
    %v781 = vpop.permute.xlu0 %780
    %v782 = vsel %vm428, %v773, %v775
    %v783 = vsel %vm428, %v775, %v777
    %v784 = vsel %vm428, %v777, %v779
    %v785 = vsel %vm428, %v779, %v781
    %v790 = vadd.f32 %v725, %v782
    %v791 = vadd.f32 %v726, %v783
    %v792 = vadd.f32 %v727, %v784
    %v793 = vadd.f32 %v728, %v785
    %v794 = vld [vmem:[#allocation2 + $0xc8] sm:$0xf]
    %v795 = vld [vmem:[#allocation2 + $0xd0] sm:$0xf]
    %v796 = vld [vmem:[#allocation2 + $0xd8] sm:$0xf]
    %v797 = vld [vmem:[#allocation2 + $0xe0] sm:$0xf]
    %v798 = vld [vmem:[#allocation2 + $0xe8] sm:$0xf]
    %s799 = scalar_lea.vmem %s1, 32
    %v800 = vld [vmem:[%s799] ss:$8 sm:$0xf]
    %v802 = vperm.slane %v800, 0
    %v803 = vperm.slane %v800, 1
    %v804 = vperm.slane %v800, 2
    %v805 = vperm.slane %v800, 3
    %806 = vrot.lane.b32.xlu0 %v802, 17
    %v807 = vpop.permute.xlu0 %806
    %808 = vrot.lane.b32.xlu0 %v803, 17
    %v809 = vpop.permute.xlu0 %808
    %810 = vrot.lane.b32.xlu0 %v804, 17
    %v811 = vpop.permute.xlu0 %810
    %812 = vrot.lane.b32.xlu0 %v805, 17
    %v813 = vpop.permute.xlu0 %812
    %v814 = vsel %vm395, %v807, %v809
    %v815 = vsel %vm395, %v809, %v811
    %v816 = vsel %vm395, %v811, %v813
    %v822 = vmul.f32 %v794, %v807
    %v823 = vmul.f32 %v795, %v814
    %v824 = vmul.f32 %v796, %v815
    %v825 = vmul.f32 %v797, %v816
    %v826 = vmul.f32 %v798, %v813
    %832 = vrot.lane.b32.xlu0 %v822, 111
    %v833 = vpop.permute.xlu0 %832
    %834 = vrot.lane.b32.xlu0 %v823, 111
    %v835 = vpop.permute.xlu0 %834
    %836 = vrot.lane.b32.xlu0 %v824, 111
    %v837 = vpop.permute.xlu0 %836
    %838 = vrot.lane.b32.xlu0 %v825, 111
    %v839 = vpop.permute.xlu0 %838
    %840 = vrot.lane.b32.xlu0 %v826, 111
    %v841 = vpop.permute.xlu0 %840
    %v842 = vsel %vm366, %v833, %v835
    %v843 = vsel %vm366, %v835, %v837
    %v844 = vsel %vm366, %v837, %v839
    %v845 = vsel %vm366, %v839, %v841
    %v850 = vadd.f32 %v790, %v842
    %v851 = vadd.f32 %v791, %v843
    %v852 = vadd.f32 %v792, %v844
    %v853 = vadd.f32 %v793, %v845
    %v858 = vrot.slane %v850, 4
    %v859 = vrot.slane %v851, 4
    %v860 = vrot.slane %v852, 4
    %v861 = vrot.slane %v853, 4
    %866 = vst [vmem:[#allocation5] sm:$0xf0] %v858
    %867 = vst [vmem:[#allocation5 + $0x8] sm:$0xf0] %v859
    %868 = vst [vmem:[#allocation5 + $0x10] sm:$0xf0] %v860
    %869 = vst [vmem:[#allocation5 + $0x18] sm:$0xf0] %v861
    %v870 = vsel %vm100, %v850, 0.0
    %v871 = vsel %vm100, %v851, 0.0
    %v872 = vadd.f32 %v870, %v871
    %v873 = vsel %vm100, %v852, 0.0
    %v874 = vadd.f32 %v872, %v873
    %v875 = vsel %vm100, %v853, 0.0
    %v876 = vadd.f32 %v874, %v875
    %877 = vadd.xlane.f32.xlu0 %v876
    %v878 = vpop.xlane.xlu0 %877
    %v879 = vmul.f32 %v878, 0.001953125
    %v880 = vmul.f32 %v850, %v850
    %v881 = vmul.f32 %v851, %v851
    %v882 = vmul.f32 %v852, %v852
    %v883 = vmul.f32 %v853, %v853
    %v884 = vsel %vm100, %v880, 0.0
    %v885 = vsel %vm100, %v881, 0.0
    %v886 = vadd.f32 %v884, %v885
    %v887 = vsel %vm100, %v882, 0.0
    %v888 = vadd.f32 %v886, %v887
    %v889 = vsel %vm100, %v883, 0.0
    %v890 = vadd.f32 %v888, %v889
    %891 = vadd.xlane.f32.xlu0 %v890
    %v892 = vpop.xlane.xlu0 %891
    %v893 = vmul.f32 %v892, 0.001953125
    %894 = vst.msk [vmem:[#allocation3 + $0x4] sm:$0xf] %vm136, %v879
    %v895 = vmul.f32 %v879, %v879
    %v896 = vsub.f32 %v893, %v895
    %v897 = vmax.f32 %v896, 0.0
    %898 = vst.msk [vmem:[#allocation4 + $0x4] sm:$0xf] %vm136, %v897
    %v899 = vld [vmem:[%s5] sm:$0xff]
    %v900 = vld [vmem:[%s6] sm:$0xff]
    %v901 = vld [vmem:[%s7] sm:$0xf]
    %v902 = vld [vmem:[%s7 + $0x4] sm:$0xf]
    %v903 = vld [vmem:[%s7 + $0x8] sm:$0xf]
    %v904 = vld [vmem:[%s7 + $0xc] sm:$0xf]
    %v905 = vld [vmem:[%s7 + $0x10] sm:$0x3]
    %v906 = vld [vmem:[#allocation4] sm:$0xff]
    %v907 = vadd.f32 %v906, 1e-05
    %v908 = vrsqrt.pop %v907
    %v909 = vmul.f32 %v908, %v907
    %v910 = vmul.f32 %v909, %v908
    %v911 = vmul.f32 0.5, %v910
    %v912 = vsub.f32 1.5, %v911
    %v913 = vmul.f32 %v908, %v912
    %vm914 = vweird.f32 %v907
    %vm915 = vweird.f32 %v908
    %vm916 = vmor %vm914, %vm915
    %v917 = vsel %vm916, %v908, %v913
    %v918 = vmul.f32 %v899, %v917
    %v919 = vld [vmem:[#allocation3] sm:$0xff]
    %v920 = vmul.f32 %v919, %v918
    %v921 = vsub.f32 %v900, %v920
    %v922 = vld [vmem:[#allocation5] sm:$0xff]
    %v923 = vld [vmem:[#allocation5 + $0x8] sm:$0xff]
    %v924 = vld [vmem:[#allocation5 + $0x10] sm:$0xff]
    %v925 = vld [vmem:[#allocation5 + $0x18] sm:$0xff]
    %927 = vset.pattern.permute.xlu0 0
    %928 = vperm.xlu0 %927, %v918
    %v929 = vpop.permute.xlu0 %928
    %v931 = vmul.f32 %v922, %v929
    %v932 = vmul.f32 %v923, %v929
    %v933 = vmul.f32 %v924, %v929
    %v934 = vmul.f32 %v925, %v929
    %936 = vset.pattern.permute.xlu0 0
    %937 = vperm.xlu0 %936, %v921
    %v938 = vpop.permute.xlu0 %937
    %v940 = vadd.f32 %v931, %v938
    %v941 = vadd.f32 %v932, %v938
    %v942 = vadd.f32 %v933, %v938
    %v943 = vadd.f32 %v934, %v938
    %v944 = vmax.f32 %v940, 0.0
    %v945 = vmax.f32 %v941, 0.0
    %v946 = vmax.f32 %v942, 0.0
    %v947 = vmax.f32 %v943, 0.0
    %v948 = vpack.c.bf16 %v944, %v944
    %v949 = vpack.c.bf16 %v945, %v945
    %v950 = vpack.c.bf16 %v946, %v946
    %v951 = vpack.c.bf16 %v947, %v947
    %v957 = vunpack.c.l.b16 %v901
    %v958 = vunpack.c.l.b16 %v902
    %v959 = vunpack.c.l.b16 %v903
    %v960 = vunpack.c.l.b16 %v904
    %v961 = vunpack.c.l.b16 %v905
    %v962 = vpack.c.b16 %v958, %v957
    %v963 = vpack.c.b16 %v960, %v959
    %v964 = vpack.c.b16 %v961, %v961
    %vm965 = vcmask 64512
    %v967 = vsel %vm965, %v962, 0
    %v970 = vsel %vm965, %v963, 0
    %v973 = vsel %vm965, %v964, 0
    %v976 = vsel %vm100, %v948, 0
    %v979 = vsel %vm100, %v949, 0
    %v982 = vsel %vm100, %v950, 0
    %v985 = vsel %vm100, %v951, 0
    %987 = vmatpush.bf16.msra.mxu0 0
    %988 = vmatpush.bf16.msra.mxu0 0
    %989 = vmatpush.bf16.msra.mxu0 0
    %990 = vmatpush.bf16.msra.mxu0 0
    %991 = vmatpush.bf16.msra.mxu0 0
    %992 = vmatpush.bf16.msra.mxu0 0
    %993 = vmatpush.bf16.msra.mxu0 0
    %994 = vmatpush.bf16.msra.mxu0 %v976
    %995 = vmatmul.bf16.gmra.mxu0 %v967
    %v996 = vpop.f32.mrf.mxu0
    %v997 = vadd.f32 0.0, %v996
    %v998 = vpop.f32.mrf.mxu0
    %v999 = vadd.f32 0.0, %v998
    %1000 = vmatmul.bf16.gmra.mxu0 %v970
    %v1001 = vpop.f32.mrf.mxu0
    %v1002 = vadd.f32 0.0, %v1001
    %v1003 = vpop.f32.mrf.mxu0
    %v1004 = vadd.f32 0.0, %v1003
    %1005 = vmatmul.bf16.gmra.mxu0 %v973
    %v1006 = vpop.f32.mrf.mxu0
    %v1007 = vadd.f32 0.0, %v1006
    %v1008 = vpop.f32.mrf.mxu0
    %1009 = vdwg.mxu0
    %1010 = vmatpush.bf16.msra.mxu0 0
    %1011 = vmatpush.bf16.msra.mxu0 0
    %1012 = vmatpush.bf16.msra.mxu0 0
    %1013 = vmatpush.bf16.msra.mxu0 0
    %1014 = vmatpush.bf16.msra.mxu0 0
    %1015 = vmatpush.bf16.msra.mxu0 0
    %1016 = vmatpush.bf16.msra.mxu0 0
    %1017 = vmatpush.bf16.msra.mxu0 %v979
    %1018 = vmatmul.bf16.gmra.mxu0 %v967
    %v1019 = vpop.f32.mrf.mxu0
    %v1020 = vadd.f32 0.0, %v1019
    %v1021 = vpop.f32.mrf.mxu0
    %v1022 = vadd.f32 0.0, %v1021
    %1023 = vmatmul.bf16.gmra.mxu0 %v970
    %v1024 = vpop.f32.mrf.mxu0
    %v1025 = vadd.f32 0.0, %v1024
    %v1026 = vpop.f32.mrf.mxu0
    %v1027 = vadd.f32 0.0, %v1026
    %1028 = vmatmul.bf16.gmra.mxu0 %v973
    %v1029 = vpop.f32.mrf.mxu0
    %v1030 = vadd.f32 0.0, %v1029
    %v1031 = vpop.f32.mrf.mxu0
    %1032 = vdwg.mxu0
    %1033 = vmatpush.bf16.msra.mxu0 0
    %1034 = vmatpush.bf16.msra.mxu0 0
    %1035 = vmatpush.bf16.msra.mxu0 0
    %1036 = vmatpush.bf16.msra.mxu0 0
    %1037 = vmatpush.bf16.msra.mxu0 0
    %1038 = vmatpush.bf16.msra.mxu0 0
    %1039 = vmatpush.bf16.msra.mxu0 0
    %1040 = vmatpush.bf16.msra.mxu0 %v982
    %1041 = vmatmul.bf16.gmra.mxu0 %v967
    %v1042 = vpop.f32.mrf.mxu0
    %v1043 = vadd.f32 0.0, %v1042
    %v1044 = vpop.f32.mrf.mxu0
    %v1045 = vadd.f32 0.0, %v1044
    %1046 = vmatmul.bf16.gmra.mxu0 %v970
    %v1047 = vpop.f32.mrf.mxu0
    %v1048 = vadd.f32 0.0, %v1047
    %v1049 = vpop.f32.mrf.mxu0
    %v1050 = vadd.f32 0.0, %v1049
    %1051 = vmatmul.bf16.gmra.mxu0 %v973
    %v1052 = vpop.f32.mrf.mxu0
    %v1053 = vadd.f32 0.0, %v1052
    %v1054 = vpop.f32.mrf.mxu0
    %1055 = vdwg.mxu0
    %1056 = vmatpush.bf16.msra.mxu0 0
    %1057 = vmatpush.bf16.msra.mxu0 0
    %1058 = vmatpush.bf16.msra.mxu0 0
    %1059 = vmatpush.bf16.msra.mxu0 0
    %1060 = vmatpush.bf16.msra.mxu0 0
    %1061 = vmatpush.bf16.msra.mxu0 0
    %1062 = vmatpush.bf16.msra.mxu0 0
    %1063 = vmatpush.bf16.msra.mxu0 %v985
    %1064 = vmatmul.bf16.gmra.mxu0 %v967
    %v1065 = vpop.f32.mrf.mxu0
    %v1066 = vadd.f32 0.0, %v1065
    %v1067 = vpop.f32.mrf.mxu0
    %v1068 = vadd.f32 0.0, %v1067
    %1069 = vmatmul.bf16.gmra.mxu0 %v970
    %v1070 = vpop.f32.mrf.mxu0
    %v1071 = vadd.f32 0.0, %v1070
    %v1072 = vpop.f32.mrf.mxu0
    %v1073 = vadd.f32 0.0, %v1072
    %1074 = vmatmul.bf16.gmra.mxu0 %v973
    %v1075 = vpop.f32.mrf.mxu0
    %v1076 = vadd.f32 0.0, %v1075
    %v1077 = vpop.f32.mrf.mxu0
    %1078 = vdwg.mxu0
    %1079 = vst [vmem:[#allocation2 + $0x8] sm:$0xff] %v997
    %1080 = vst [vmem:[#allocation2 + $0x10] sm:$0xff] %v1020
    %1081 = vst [vmem:[#allocation2 + $0x18] sm:$0xff] %v1043
    %1082 = vst [vmem:[#allocation2 + $0x20] sm:$0xff] %v1066
    %1083 = vst [vmem:[#allocation2 + $0x38] sm:$0xff] %v999
    %1084 = vst [vmem:[#allocation2 + $0x40] sm:$0xff] %v1022
    %1085 = vst [vmem:[#allocation2 + $0x48] sm:$0xff] %v1045
    %1086 = vst [vmem:[#allocation2 + $0x50] sm:$0xff] %v1068
    %1087 = vst [vmem:[#allocation2 + $0x68] sm:$0xff] %v1002
    %1088 = vst [vmem:[#allocation2 + $0x70] sm:$0xff] %v1025
    %1089 = vst [vmem:[#allocation2 + $0x78] sm:$0xff] %v1048
    %1090 = vst [vmem:[#allocation2 + $0x80] sm:$0xff] %v1071
    %1091 = vst [vmem:[#allocation2 + $0x98] sm:$0xff] %v1004
    %1092 = vst [vmem:[#allocation2 + $0xa0] sm:$0xff] %v1027
    %1093 = vst [vmem:[#allocation2 + $0xa8] sm:$0xff] %v1050
    %1094 = vst [vmem:[#allocation2 + $0xb0] sm:$0xff] %v1073
    %1095 = vst [vmem:[#allocation2 + $0xc8] sm:$0xf] %v1007
    %1096 = vst [vmem:[#allocation2 + $0xd0] sm:$0xf] %v1030
    %1097 = vst [vmem:[#allocation2 + $0xd8] sm:$0xf] %v1053
    %1098 = vst [vmem:[#allocation2 + $0xe0] sm:$0xf] %v1076
    %v1099 = vld [vmem:[#allocation2 + $0x68] sm:$0xf]
    %v1100 = vld [vmem:[#allocation2 + $0x70] sm:$0xf]
    %v1101 = vld [vmem:[#allocation2 + $0x78] sm:$0xf]
    %v1102 = vld [vmem:[#allocation2 + $0x80] sm:$0xf]
    %v1103 = vld [vmem:[#allocation2] sm:$0xf]
    %v1104 = vld [vmem:[#allocation2 + $0x8] sm:$0xf]
    %v1105 = vld [vmem:[#allocation2 + $0x10] sm:$0xf]
    %v1106 = vld [vmem:[#allocation2 + $0x18] sm:$0xf]
    %v1107 = vld [vmem:[#allocation2 + $0x20] sm:$0xf]
    %v1108 = vld [vmem:[%s1] ss:$8 sm:$0xf]
    %v1110 = vperm.slane %v1108, 0
    %v1111 = vperm.slane %v1108, 1
    %v1112 = vperm.slane %v1108, 2
    %v1113 = vperm.slane %v1108, 3
    %1114 = vrot.lane.b32.xlu0 %v1110, 111
    %v1115 = vpop.permute.xlu0 %1114
    %1116 = vrot.lane.b32.xlu0 %v1111, 111
    %v1117 = vpop.permute.xlu0 %1116
    %1118 = vrot.lane.b32.xlu0 %v1112, 111
    %v1119 = vpop.permute.xlu0 %1118
    %1120 = vrot.lane.b32.xlu0 %v1113, 111
    %v1121 = vpop.permute.xlu0 %1120
    %v1122 = vsel %vm366, %v1115, %v1117
    %v1123 = vsel %vm366, %v1117, %v1119
    %v1124 = vsel %vm366, %v1119, %v1121
    %v1130 = vmul.f32 %v1103, %v1115
    %v1131 = vmul.f32 %v1104, %v1122
    %v1132 = vmul.f32 %v1105, %v1123
    %v1133 = vmul.f32 %v1106, %v1124
    %v1134 = vmul.f32 %v1107, %v1121
    %1140 = vrot.lane.b32.xlu0 %v1130, 17
    %v1141 = vpop.permute.xlu0 %1140
    %1142 = vrot.lane.b32.xlu0 %v1131, 17
    %v1143 = vpop.permute.xlu0 %1142
    %1144 = vrot.lane.b32.xlu0 %v1132, 17
    %v1145 = vpop.permute.xlu0 %1144
    %1146 = vrot.lane.b32.xlu0 %v1133, 17
    %v1147 = vpop.permute.xlu0 %1146
    %1148 = vrot.lane.b32.xlu0 %v1134, 17
    %v1149 = vpop.permute.xlu0 %1148
    %v1150 = vsel %vm395, %v1141, %v1143
    %v1151 = vsel %vm395, %v1143, %v1145
    %v1152 = vsel %vm395, %v1145, %v1147
    %v1153 = vsel %vm395, %v1147, %v1149
    %v1158 = vadd.f32 %v1099, %v1150
    %v1159 = vadd.f32 %v1100, %v1151
    %v1160 = vadd.f32 %v1101, %v1152
    %v1161 = vadd.f32 %v1102, %v1153
    %v1162 = vld [vmem:[#allocation2] sm:$0xf0]
    %v1163 = vld [vmem:[#allocation2 + $0x8] sm:$0xf0]
    %v1164 = vld [vmem:[#allocation2 + $0x10] sm:$0xf0]
    %v1165 = vld [vmem:[#allocation2 + $0x18] sm:$0xf0]
    %v1166 = vld [vmem:[#allocation2 + $0x20] sm:$0xf0]
    %v1167 = vld [vmem:[%s413] ss:$8 sm:$0xf]
    %v1169 = vperm.slane %v1167, 0
    %v1170 = vperm.slane %v1167, 1
    %v1171 = vperm.slane %v1167, 2
    %v1172 = vperm.slane %v1167, 3
    %1173 = vrot.lane.b32.xlu0 %v1169, 112
    %v1174 = vpop.permute.xlu0 %1173
    %1175 = vrot.lane.b32.xlu0 %v1170, 112
    %v1176 = vpop.permute.xlu0 %1175
    %1177 = vrot.lane.b32.xlu0 %v1171, 112
    %v1178 = vpop.permute.xlu0 %1177
    %1179 = vrot.lane.b32.xlu0 %v1172, 112
    %v1180 = vpop.permute.xlu0 %1179
    %v1181 = vsel %vm428, %v1174, %v1176
    %v1182 = vsel %vm428, %v1176, %v1178
    %v1183 = vsel %vm428, %v1178, %v1180
    %v1189 = vmul.f32 %v1162, %v1174
    %v1190 = vmul.f32 %v1163, %v1181
    %v1191 = vmul.f32 %v1164, %v1182
    %v1192 = vmul.f32 %v1165, %v1183
    %v1193 = vmul.f32 %v1166, %v1180
    %v1199 = vrot.slane %v1189, 4
    %v1200 = vrot.slane %v1190, 4
    %v1201 = vrot.slane %v1191, 4
    %v1202 = vrot.slane %v1192, 4
    %v1203 = vrot.slane %v1193, 4
    %1204 = vrot.lane.b32.xlu0 %v1199, 16
    %v1205 = vpop.permute.xlu0 %1204
    %1206 = vrot.lane.b32.xlu0 %v1200, 16
    %v1207 = vpop.permute.xlu0 %1206
    %1208 = vrot.lane.b32.xlu0 %v1201, 16
    %v1209 = vpop.permute.xlu0 %1208
    %1210 = vrot.lane.b32.xlu0 %v1202, 16
    %v1211 = vpop.permute.xlu0 %1210
    %1212 = vrot.lane.b32.xlu0 %v1203, 16
    %v1213 = vpop.permute.xlu0 %1212
    %v1214 = vsel %vm462, %v1205, %v1207
    %v1215 = vsel %vm462, %v1207, %v1209
    %v1216 = vsel %vm462, %v1209, %v1211
    %v1217 = vsel %vm462, %v1211, %v1213
    %v1222 = vadd.f32 %v1158, %v1214
    %v1223 = vadd.f32 %v1159, %v1215
    %v1224 = vadd.f32 %v1160, %v1216
    %v1225 = vadd.f32 %v1161, %v1217
    %v1226 = vld [vmem:[#allocation2 + $0x30] sm:$0xf]
    %v1227 = vld [vmem:[#allocation2 + $0x38] sm:$0xf]
    %v1228 = vld [vmem:[#allocation2 + $0x40] sm:$0xf]
    %v1229 = vld [vmem:[#allocation2 + $0x48] sm:$0xf]
    %v1230 = vld [vmem:[#allocation2 + $0x50] sm:$0xf]
    %v1231 = vld [vmem:[%s480] ss:$8 sm:$0xf]
    %v1233 = vperm.slane %v1231, 0
    %v1234 = vperm.slane %v1231, 1
    %v1235 = vperm.slane %v1231, 2
    %v1236 = vperm.slane %v1231, 3
    %1237 = vrot.lane.b32.xlu0 %v1233, 113
    %v1238 = vpop.permute.xlu0 %1237
    %1239 = vrot.lane.b32.xlu0 %v1234, 113
    %v1240 = vpop.permute.xlu0 %1239
    %1241 = vrot.lane.b32.xlu0 %v1235, 113
    %v1242 = vpop.permute.xlu0 %1241
    %1243 = vrot.lane.b32.xlu0 %v1236, 113
    %v1244 = vpop.permute.xlu0 %1243
    %v1245 = vsel %vm495, %v1238, %v1240
    %v1246 = vsel %vm495, %v1240, %v1242
    %v1247 = vsel %vm495, %v1242, %v1244
    %v1253 = vmul.f32 %v1226, %v1238
    %v1254 = vmul.f32 %v1227, %v1245
    %v1255 = vmul.f32 %v1228, %v1246
    %v1256 = vmul.f32 %v1229, %v1247
    %v1257 = vmul.f32 %v1230, %v1244
    %1263 = vrot.lane.b32.xlu0 %v1253, 15
    %v1264 = vpop.permute.xlu0 %1263
    %1265 = vrot.lane.b32.xlu0 %v1254, 15
    %v1266 = vpop.permute.xlu0 %1265
    %1267 = vrot.lane.b32.xlu0 %v1255, 15
    %v1268 = vpop.permute.xlu0 %1267
    %1269 = vrot.lane.b32.xlu0 %v1256, 15
    %v1270 = vpop.permute.xlu0 %1269
    %1271 = vrot.lane.b32.xlu0 %v1257, 15
    %v1272 = vpop.permute.xlu0 %1271
    %v1273 = vsel %vm524, %v1264, %v1266
    %v1274 = vsel %vm524, %v1266, %v1268
    %v1275 = vsel %vm524, %v1268, %v1270
    %v1276 = vsel %vm524, %v1270, %v1272
    %v1281 = vadd.f32 %v1222, %v1273
    %v1282 = vadd.f32 %v1223, %v1274
    %v1283 = vadd.f32 %v1224, %v1275
    %v1284 = vadd.f32 %v1225, %v1276
    %v1285 = vld [vmem:[#allocation2 + $0x30] sm:$0xf0]
    %v1286 = vld [vmem:[#allocation2 + $0x38] sm:$0xf0]
    %v1287 = vld [vmem:[#allocation2 + $0x40] sm:$0xf0]
    %v1288 = vld [vmem:[#allocation2 + $0x48] sm:$0xf0]
    %v1289 = vld [vmem:[#allocation2 + $0x50] sm:$0xf0]
    %v1290 = vld [vmem:[%s542] ss:$8 sm:$0xf]
    %v1292 = vperm.slane %v1290, 0
    %v1293 = vperm.slane %v1290, 1
    %v1294 = vperm.slane %v1290, 2
    %v1295 = vperm.slane %v1290, 3
    %1296 = vrot.lane.b32.xlu0 %v1292, 127
    %v1297 = vpop.permute.xlu0 %1296
    %1298 = vrot.lane.b32.xlu0 %v1293, 127
    %v1299 = vpop.permute.xlu0 %1298
    %1300 = vrot.lane.b32.xlu0 %v1294, 127
    %v1301 = vpop.permute.xlu0 %1300
    %1302 = vrot.lane.b32.xlu0 %v1295, 127
    %v1303 = vpop.permute.xlu0 %1302
    %v1304 = vsel %vm557, %v1297, %v1299
    %v1305 = vsel %vm557, %v1299, %v1301
    %v1306 = vsel %vm557, %v1301, %v1303
    %v1312 = vmul.f32 %v1285, %v1297
    %v1313 = vmul.f32 %v1286, %v1304
    %v1314 = vmul.f32 %v1287, %v1305
    %v1315 = vmul.f32 %v1288, %v1306
    %v1316 = vmul.f32 %v1289, %v1303
    %v1322 = vrot.slane %v1312, 4
    %v1323 = vrot.slane %v1313, 4
    %v1324 = vrot.slane %v1314, 4
    %v1325 = vrot.slane %v1315, 4
    %v1326 = vrot.slane %v1316, 4
    %1327 = vrot.lane.b32.xlu0 %v1322, 1
    %v1328 = vpop.permute.xlu0 %1327
    %1329 = vrot.lane.b32.xlu0 %v1323, 1
    %v1330 = vpop.permute.xlu0 %1329
    %1331 = vrot.lane.b32.xlu0 %v1324, 1
    %v1332 = vpop.permute.xlu0 %1331
    %1333 = vrot.lane.b32.xlu0 %v1325, 1
    %v1334 = vpop.permute.xlu0 %1333
    %1335 = vrot.lane.b32.xlu0 %v1326, 1
    %v1336 = vpop.permute.xlu0 %1335
    %v1337 = vsel %vm591, %v1328, %v1330
    %v1338 = vsel %vm591, %v1330, %v1332
    %v1339 = vsel %vm591, %v1332, %v1334
    %v1340 = vsel %vm591, %v1334, %v1336
    %v1345 = vadd.f32 %v1281, %v1337
    %v1346 = vadd.f32 %v1282, %v1338
    %v1347 = vadd.f32 %v1283, %v1339
    %v1348 = vadd.f32 %v1284, %v1340
    %v1349 = vld [vmem:[#allocation2 + $0x68] sm:$0xf0]
    %v1350 = vld [vmem:[#allocation2 + $0x70] sm:$0xf0]
    %v1351 = vld [vmem:[#allocation2 + $0x78] sm:$0xf0]
    %v1352 = vld [vmem:[#allocation2 + $0x80] sm:$0xf0]
    %v1353 = vld [vmem:[#allocation2 + $0x88] sm:$0xf0]
    %v1354 = vld [vmem:[%s609] ss:$8 sm:$0xf]
    %v1356 = vperm.slane %v1354, 0
    %v1357 = vperm.slane %v1354, 1
    %v1358 = vperm.slane %v1354, 2
    %v1359 = vperm.slane %v1354, 3
    %1360 = vrot.lane.b32.xlu0 %v1356, 1
    %v1361 = vpop.permute.xlu0 %1360
    %1362 = vrot.lane.b32.xlu0 %v1357, 1
    %v1363 = vpop.permute.xlu0 %1362
    %1364 = vrot.lane.b32.xlu0 %v1358, 1
    %v1365 = vpop.permute.xlu0 %1364
    %1366 = vrot.lane.b32.xlu0 %v1359, 1
    %v1367 = vpop.permute.xlu0 %1366
    %v1368 = vsel %vm591, %v1361, %v1363
    %v1369 = vsel %vm591, %v1363, %v1365
    %v1370 = vsel %vm591, %v1365, %v1367
    %v1376 = vmul.f32 %v1349, %v1361
    %v1377 = vmul.f32 %v1350, %v1368
    %v1378 = vmul.f32 %v1351, %v1369
    %v1379 = vmul.f32 %v1352, %v1370
    %v1380 = vmul.f32 %v1353, %v1367
    %v1386 = vrot.slane %v1376, 4
    %v1387 = vrot.slane %v1377, 4
    %v1388 = vrot.slane %v1378, 4
    %v1389 = vrot.slane %v1379, 4
    %v1390 = vrot.slane %v1380, 4
    %1391 = vrot.lane.b32.xlu0 %v1386, 127
    %v1392 = vpop.permute.xlu0 %1391
    %1393 = vrot.lane.b32.xlu0 %v1387, 127
    %v1394 = vpop.permute.xlu0 %1393
    %1395 = vrot.lane.b32.xlu0 %v1388, 127
    %v1396 = vpop.permute.xlu0 %1395
    %1397 = vrot.lane.b32.xlu0 %v1389, 127
    %v1398 = vpop.permute.xlu0 %1397
    %1399 = vrot.lane.b32.xlu0 %v1390, 127
    %v1400 = vpop.permute.xlu0 %1399
    %v1401 = vsel %vm557, %v1392, %v1394
    %v1402 = vsel %vm557, %v1394, %v1396
    %v1403 = vsel %vm557, %v1396, %v1398
    %v1404 = vsel %vm557, %v1398, %v1400
    %v1409 = vadd.f32 %v1345, %v1401
    %v1410 = vadd.f32 %v1346, %v1402
    %v1411 = vadd.f32 %v1347, %v1403
    %v1412 = vadd.f32 %v1348, %v1404
    %v1413 = vld [vmem:[#allocation2 + $0x98] sm:$0xf]
    %v1414 = vld [vmem:[#allocation2 + $0xa0] sm:$0xf]
    %v1415 = vld [vmem:[#allocation2 + $0xa8] sm:$0xf]
    %v1416 = vld [vmem:[#allocation2 + $0xb0] sm:$0xf]
    %v1417 = vld [vmem:[#allocation2 + $0xb8] sm:$0xf]
    %v1418 = vld [vmem:[%s674] ss:$8 sm:$0xf]
    %v1420 = vperm.slane %v1418, 0
    %v1421 = vperm.slane %v1418, 1
    %v1422 = vperm.slane %v1418, 2
    %v1423 = vperm.slane %v1418, 3
    %1424 = vrot.lane.b32.xlu0 %v1420, 15
    %v1425 = vpop.permute.xlu0 %1424
    %1426 = vrot.lane.b32.xlu0 %v1421, 15
    %v1427 = vpop.permute.xlu0 %1426
    %1428 = vrot.lane.b32.xlu0 %v1422, 15
    %v1429 = vpop.permute.xlu0 %1428
    %1430 = vrot.lane.b32.xlu0 %v1423, 15
    %v1431 = vpop.permute.xlu0 %1430
    %v1432 = vsel %vm524, %v1425, %v1427
    %v1433 = vsel %vm524, %v1427, %v1429
    %v1434 = vsel %vm524, %v1429, %v1431
    %v1440 = vmul.f32 %v1413, %v1425
    %v1441 = vmul.f32 %v1414, %v1432
    %v1442 = vmul.f32 %v1415, %v1433
    %v1443 = vmul.f32 %v1416, %v1434
    %v1444 = vmul.f32 %v1417, %v1431
    %1450 = vrot.lane.b32.xlu0 %v1440, 113
    %v1451 = vpop.permute.xlu0 %1450
    %1452 = vrot.lane.b32.xlu0 %v1441, 113
    %v1453 = vpop.permute.xlu0 %1452
    %1454 = vrot.lane.b32.xlu0 %v1442, 113
    %v1455 = vpop.permute.xlu0 %1454
    %1456 = vrot.lane.b32.xlu0 %v1443, 113
    %v1457 = vpop.permute.xlu0 %1456
    %1458 = vrot.lane.b32.xlu0 %v1444, 113
    %v1459 = vpop.permute.xlu0 %1458
    %v1460 = vsel %vm495, %v1451, %v1453
    %v1461 = vsel %vm495, %v1453, %v1455
    %v1462 = vsel %vm495, %v1455, %v1457
    %v1463 = vsel %vm495, %v1457, %v1459
    %v1468 = vadd.f32 %v1409, %v1460
    %v1469 = vadd.f32 %v1410, %v1461
    %v1470 = vadd.f32 %v1411, %v1462
    %v1471 = vadd.f32 %v1412, %v1463
    %v1472 = vld [vmem:[#allocation2 + $0x98] sm:$0xf0]
    %v1473 = vld [vmem:[#allocation2 + $0xa0] sm:$0xf0]
    %v1474 = vld [vmem:[#allocation2 + $0xa8] sm:$0xf0]
    %v1475 = vld [vmem:[#allocation2 + $0xb0] sm:$0xf0]
    %v1476 = vld [vmem:[#allocation2 + $0xb8] sm:$0xf0]
    %v1477 = vld [vmem:[%s734] ss:$8 sm:$0xf]
    %v1479 = vperm.slane %v1477, 0
    %v1480 = vperm.slane %v1477, 1
    %v1481 = vperm.slane %v1477, 2
    %v1482 = vperm.slane %v1477, 3
    %1483 = vrot.lane.b32.xlu0 %v1479, 16
    %v1484 = vpop.permute.xlu0 %1483
    %1485 = vrot.lane.b32.xlu0 %v1480, 16
    %v1486 = vpop.permute.xlu0 %1485
    %1487 = vrot.lane.b32.xlu0 %v1481, 16
    %v1488 = vpop.permute.xlu0 %1487
    %1489 = vrot.lane.b32.xlu0 %v1482, 16
    %v1490 = vpop.permute.xlu0 %1489
    %v1491 = vsel %vm462, %v1484, %v1486
    %v1492 = vsel %vm462, %v1486, %v1488
    %v1493 = vsel %vm462, %v1488, %v1490
    %v1499 = vmul.f32 %v1472, %v1484
    %v1500 = vmul.f32 %v1473, %v1491
    %v1501 = vmul.f32 %v1474, %v1492
    %v1502 = vmul.f32 %v1475, %v1493
    %v1503 = vmul.f32 %v1476, %v1490
    %v1509 = vrot.slane %v1499, 4
    %v1510 = vrot.slane %v1500, 4
    %v1511 = vrot.slane %v1501, 4
    %v1512 = vrot.slane %v1502, 4
    %v1513 = vrot.slane %v1503, 4
    %1514 = vrot.lane.b32.xlu0 %v1509, 112
    %v1515 = vpop.permute.xlu0 %1514
    %1516 = vrot.lane.b32.xlu0 %v1510, 112
    %v1517 = vpop.permute.xlu0 %1516
    %1518 = vrot.lane.b32.xlu0 %v1511, 112
    %v1519 = vpop.permute.xlu0 %1518
    %1520 = vrot.lane.b32.xlu0 %v1512, 112
    %v1521 = vpop.permute.xlu0 %1520
    %1522 = vrot.lane.b32.xlu0 %v1513, 112
    %v1523 = vpop.permute.xlu0 %1522
    %v1524 = vsel %vm428, %v1515, %v1517
    %v1525 = vsel %vm428, %v1517, %v1519
    %v1526 = vsel %vm428, %v1519, %v1521
    %v1527 = vsel %vm428, %v1521, %v1523
    %v1532 = vadd.f32 %v1468, %v1524
    %v1533 = vadd.f32 %v1469, %v1525
    %v1534 = vadd.f32 %v1470, %v1526
    %v1535 = vadd.f32 %v1471, %v1527
    %v1536 = vld [vmem:[#allocation2 + $0xc8] sm:$0xf]
    %v1537 = vld [vmem:[#allocation2 + $0xd0] sm:$0xf]
    %v1538 = vld [vmem:[#allocation2 + $0xd8] sm:$0xf]
    %v1539 = vld [vmem:[#allocation2 + $0xe0] sm:$0xf]
    %v1540 = vld [vmem:[#allocation2 + $0xe8] sm:$0xf]
    %v1541 = vld [vmem:[%s799] ss:$8 sm:$0xf]
    %v1543 = vperm.slane %v1541, 0
    %v1544 = vperm.slane %v1541, 1
    %v1545 = vperm.slane %v1541, 2
    %v1546 = vperm.slane %v1541, 3
    %1547 = vrot.lane.b32.xlu0 %v1543, 17
    %v1548 = vpop.permute.xlu0 %1547
    %1549 = vrot.lane.b32.xlu0 %v1544, 17
    %v1550 = vpop.permute.xlu0 %1549
    %1551 = vrot.lane.b32.xlu0 %v1545, 17
    %v1552 = vpop.permute.xlu0 %1551
    %1553 = vrot.lane.b32.xlu0 %v1546, 17
    %v1554 = vpop.permute.xlu0 %1553
    %v1555 = vsel %vm395, %v1548, %v1550
    %v1556 = vsel %vm395, %v1550, %v1552
    %v1557 = vsel %vm395, %v1552, %v1554
    %v1563 = vmul.f32 %v1536, %v1548
    %v1564 = vmul.f32 %v1537, %v1555
    %v1565 = vmul.f32 %v1538, %v1556
    %v1566 = vmul.f32 %v1539, %v1557
    %v1567 = vmul.f32 %v1540, %v1554
    %1573 = vrot.lane.b32.xlu0 %v1563, 111
    %v1574 = vpop.permute.xlu0 %1573
    %1575 = vrot.lane.b32.xlu0 %v1564, 111
    %v1576 = vpop.permute.xlu0 %1575
    %1577 = vrot.lane.b32.xlu0 %v1565, 111
    %v1578 = vpop.permute.xlu0 %1577
    %1579 = vrot.lane.b32.xlu0 %v1566, 111
    %v1580 = vpop.permute.xlu0 %1579
    %1581 = vrot.lane.b32.xlu0 %v1567, 111
    %v1582 = vpop.permute.xlu0 %1581
    %v1583 = vsel %vm366, %v1574, %v1576
    %v1584 = vsel %vm366, %v1576, %v1578
    %v1585 = vsel %vm366, %v1578, %v1580
    %v1586 = vsel %vm366, %v1580, %v1582
    %v1591 = vadd.f32 %v1532, %v1583
    %v1592 = vadd.f32 %v1533, %v1584
    %v1593 = vadd.f32 %v1534, %v1585
    %v1594 = vadd.f32 %v1535, %v1586
    %1595 = vst [vmem:[#allocation5 + $0x20] sm:$0xf] %v1591
    %1596 = vst [vmem:[#allocation5 + $0x28] sm:$0xf] %v1592
    %1597 = vst [vmem:[#allocation5 + $0x30] sm:$0xf] %v1593
    %1598 = vst [vmem:[#allocation5 + $0x38] sm:$0xf] %v1594
    %v1599 = vsel %vm100, %v1591, 0.0
    %v1600 = vsel %vm100, %v1592, 0.0
    %v1601 = vadd.f32 %v1599, %v1600
    %v1602 = vsel %vm100, %v1593, 0.0
    %v1603 = vadd.f32 %v1601, %v1602
    %v1604 = vsel %vm100, %v1594, 0.0
    %v1605 = vadd.f32 %v1603, %v1604
    %1606 = vadd.xlane.f32.xlu0 %v1605
    %v1607 = vpop.xlane.xlu0 %1606
    %v1608 = vmul.f32 %v1607, 0.001953125
    %v1609 = vmul.f32 %v1591, %v1591
    %v1610 = vmul.f32 %v1592, %v1592
    %v1611 = vmul.f32 %v1593, %v1593
    %v1612 = vmul.f32 %v1594, %v1594
    %v1613 = vsel %vm100, %v1609, 0.0
    %v1614 = vsel %vm100, %v1610, 0.0
    %v1615 = vadd.f32 %v1613, %v1614
    %v1616 = vsel %vm100, %v1611, 0.0
    %v1617 = vadd.f32 %v1615, %v1616
    %v1618 = vsel %vm100, %v1612, 0.0
    %v1619 = vadd.f32 %v1617, %v1618
    %1620 = vadd.xlane.f32.xlu0 %v1619
    %v1621 = vpop.xlane.xlu0 %1620
    %v1622 = vmul.f32 %v1621, 0.001953125
    %1623 = vst.msk [vmem:[#allocation3 + $0x8] sm:$0xf] %vm136, %v1608
    %v1624 = vmul.f32 %v1608, %v1608
    %v1625 = vsub.f32 %v1622, %v1624
    %v1626 = vmax.f32 %v1625, 0.0
    %1627 = vst.msk [vmem:[#allocation4 + $0x8] sm:$0xf] %vm136, %v1626
    %v1628 = vld [vmem:[%s8] sm:$0xff]
    %v1629 = vld [vmem:[%s8 + $0x8] sm:$0xf]
    %v1630 = vld [vmem:[%s9] sm:$0xff]
    %v1631 = vld [vmem:[%s9 + $0x8] sm:$0xf]
    %v1632 = vld [vmem:[%s10] sm:$0xf]
    %v1633 = vld [vmem:[%s10 + $0x4] sm:$0xf]
    %v1634 = vld [vmem:[%s10 + $0x8] sm:$0xf]
    %v1635 = vld [vmem:[%s10 + $0xc] sm:$0xf]
    %v1636 = vld [vmem:[%s10 + $0x10] sm:$0x3]
    %v1637 = vld [vmem:[#allocation4] sm:$0xff]
    %v1638 = vld [vmem:[#allocation4 + $0x8] sm:$0xf]
    %v1639 = vadd.f32 %v1637, 1e-05
    %v1640 = vadd.f32 %v1638, 1e-05
    %v1641 = vrsqrt.pop %v1639
    %v1642 = vmul.f32 %v1641, %v1639
    %v1643 = vmul.f32 %v1642, %v1641
    %v1644 = vmul.f32 0.5, %v1643
    %v1645 = vsub.f32 1.5, %v1644
    %v1646 = vmul.f32 %v1641, %v1645
    %vm1647 = vweird.f32 %v1639
    %vm1648 = vweird.f32 %v1641
    %vm1649 = vmor %vm1647, %vm1648
    %v1650 = vsel %vm1649, %v1641, %v1646
    %v1651 = vrsqrt.pop %v1640
    %v1652 = vmul.f32 %v1651, %v1640
    %v1653 = vmul.f32 %v1652, %v1651
    %v1654 = vmul.f32 0.5, %v1653
    %v1655 = vsub.f32 1.5, %v1654
    %v1656 = vmul.f32 %v1651, %v1655
    %vm1657 = vweird.f32 %v1640
    %vm1658 = vweird.f32 %v1651
    %vm1659 = vmor %vm1657, %vm1658
    %v1660 = vsel %vm1659, %v1651, %v1656
    %v1661 = vmul.f32 %v1628, %v1650
    %v1662 = vmul.f32 %v1629, %v1660
    %v1663 = vld [vmem:[#allocation3] sm:$0xff]
    %v1664 = vld [vmem:[#allocation3 + $0x8] sm:$0xf]
    %v1665 = vmul.f32 %v1663, %v1661
    %v1666 = vmul.f32 %v1664, %v1662
    %v1667 = vsub.f32 %v1630, %v1665
    %v1668 = vsub.f32 %v1631, %v1666
    %v1669 = vld [vmem:[#allocation5] sm:$0xff]
    %v1670 = vld [vmem:[#allocation5 + $0x8] sm:$0xff]
    %v1671 = vld [vmem:[#allocation5 + $0x10] sm:$0xff]
    %v1672 = vld [vmem:[#allocation5 + $0x18] sm:$0xff]
    %v1673 = vld [vmem:[#allocation5 + $0x20] sm:$0xf]
    %v1674 = vld [vmem:[#allocation5 + $0x28] sm:$0xf]
    %v1675 = vld [vmem:[#allocation5 + $0x30] sm:$0xf]
    %v1676 = vld [vmem:[#allocation5 + $0x38] sm:$0xf]
    %1678 = vset.pattern.permute.xlu0 0
    %1679 = vperm.xlu0 %1678, %v1661
    %v1680 = vpop.permute.xlu0 %1679
    %1683 = vset.pattern.permute.xlu0 0
    %1684 = vperm.xlu0 %1683, %v1662
    %v1685 = vpop.permute.xlu0 %1684
    %v1687 = vmul.f32 %v1669, %v1680
    %v1688 = vmul.f32 %v1670, %v1680
    %v1689 = vmul.f32 %v1671, %v1680
    %v1690 = vmul.f32 %v1672, %v1680
    %v1691 = vmul.f32 %v1673, %v1685
    %v1692 = vmul.f32 %v1674, %v1685
    %v1693 = vmul.f32 %v1675, %v1685
    %v1694 = vmul.f32 %v1676, %v1685
    %1696 = vset.pattern.permute.xlu0 0
    %1697 = vperm.xlu0 %1696, %v1667
    %v1698 = vpop.permute.xlu0 %1697
    %1701 = vset.pattern.permute.xlu0 0
    %1702 = vperm.xlu0 %1701, %v1668
    %v1703 = vpop.permute.xlu0 %1702
    %v1705 = vadd.f32 %v1687, %v1698
    %v1706 = vadd.f32 %v1688, %v1698
    %v1707 = vadd.f32 %v1689, %v1698
    %v1708 = vadd.f32 %v1690, %v1698
    %v1709 = vadd.f32 %v1691, %v1703
    %v1710 = vadd.f32 %v1692, %v1703
    %v1711 = vadd.f32 %v1693, %v1703
    %v1712 = vadd.f32 %v1694, %v1703
    %v1713 = vmax.f32 %v1705, 0.0
    %v1714 = vmax.f32 %v1706, 0.0
    %v1715 = vmax.f32 %v1707, 0.0
    %v1716 = vmax.f32 %v1708, 0.0
    %v1717 = vmax.f32 %v1709, 0.0
    %v1718 = vmax.f32 %v1710, 0.0
    %v1719 = vmax.f32 %v1711, 0.0
    %v1720 = vmax.f32 %v1712, 0.0
    %v1721 = vpack.c.bf16 %v1717, %v1713
    %v1722 = vpack.c.bf16 %v1718, %v1714
    %v1723 = vpack.c.bf16 %v1719, %v1715
    %v1724 = vpack.c.bf16 %v1720, %v1716
    %v1730 = vunpack.c.l.b16 %v1632
    %v1731 = vunpack.c.l.b16 %v1633
    %v1732 = vunpack.c.l.b16 %v1634
    %v1733 = vunpack.c.l.b16 %v1635
    %v1734 = vunpack.c.l.b16 %v1636
    %v1735 = vpack.c.b16 %v1731, %v1730
    %v1736 = vpack.c.b16 %v1733, %v1732
    %v1737 = vpack.c.b16 %v1734, %v1734
    %vm1738 = vcmask 97280
    %v1740 = vsel %vm1738, %v1735, 0
    %v1743 = vsel %vm1738, %v1736, 0
    %v1746 = vsel %vm1738, %v1737, 0
    %vm1748 = vcmask 1045504
    %v1750 = vsel %vm1748, %v1721, 0
    %v1753 = vsel %vm1748, %v1722, 0
    %v1756 = vsel %vm1748, %v1723, 0
    %v1759 = vsel %vm1748, %v1724, 0
    %1761 = vmatpush.bf16.msra.mxu0 0
    %1762 = vmatpush.bf16.msra.mxu0 0
    %1763 = vmatpush.bf16.msra.mxu0 0
    %1764 = vmatpush.bf16.msra.mxu0 0
    %1765 = vmatpush.bf16.msra.mxu0 0
    %1766 = vmatpush.bf16.msra.mxu0 0
    %1767 = vmatpush.bf16.msra.mxu0 0
    %1768 = vmatpush.bf16.msra.mxu0 %v1750
    %1769 = vmatmul.bf16.gmra.mxu0 %v1740
    %v1770 = vpop.f32.mrf.mxu0
    %v1771 = vadd.f32 0.0, %v1770
    %v1772 = vpop.f32.mrf.mxu0
    %v1773 = vadd.f32 0.0, %v1772
    %1774 = vmatmul.bf16.gmra.mxu0 %v1743
    %v1775 = vpop.f32.mrf.mxu0
    %v1776 = vadd.f32 0.0, %v1775
    %v1777 = vpop.f32.mrf.mxu0
    %v1778 = vadd.f32 0.0, %v1777
    %1779 = vmatmul.bf16.gmra.mxu0 %v1746
    %v1780 = vpop.f32.mrf.mxu0
    %v1781 = vadd.f32 0.0, %v1780
    %v1782 = vpop.f32.mrf.mxu0
    %1783 = vdwg.mxu0
    %1784 = vmatpush.bf16.msra.mxu0 0
    %1785 = vmatpush.bf16.msra.mxu0 0
    %1786 = vmatpush.bf16.msra.mxu0 0
    %1787 = vmatpush.bf16.msra.mxu0 0
    %1788 = vmatpush.bf16.msra.mxu0 0
    %1789 = vmatpush.bf16.msra.mxu0 0
    %1790 = vmatpush.bf16.msra.mxu0 0
    %1791 = vmatpush.bf16.msra.mxu0 %v1753
    %1792 = vmatmul.bf16.gmra.mxu0 %v1740
    %v1793 = vpop.f32.mrf.mxu0
    %v1794 = vadd.f32 0.0, %v1793
    %v1795 = vpop.f32.mrf.mxu0
    %v1796 = vadd.f32 0.0, %v1795
    %1797 = vmatmul.bf16.gmra.mxu0 %v1743
    %v1798 = vpop.f32.mrf.mxu0
    %v1799 = vadd.f32 0.0, %v1798
    %v1800 = vpop.f32.mrf.mxu0
    %v1801 = vadd.f32 0.0, %v1800
    %1802 = vmatmul.bf16.gmra.mxu0 %v1746
    %v1803 = vpop.f32.mrf.mxu0
    %v1804 = vadd.f32 0.0, %v1803
    %v1805 = vpop.f32.mrf.mxu0
    %1806 = vdwg.mxu0
    %1807 = vmatpush.bf16.msra.mxu0 0
    %1808 = vmatpush.bf16.msra.mxu0 0
    %1809 = vmatpush.bf16.msra.mxu0 0
    %1810 = vmatpush.bf16.msra.mxu0 0
    %1811 = vmatpush.bf16.msra.mxu0 0
    %1812 = vmatpush.bf16.msra.mxu0 0
    %1813 = vmatpush.bf16.msra.mxu0 0
    %1814 = vmatpush.bf16.msra.mxu0 %v1756
    %1815 = vmatmul.bf16.gmra.mxu0 %v1740
    %v1816 = vpop.f32.mrf.mxu0
    %v1817 = vadd.f32 0.0, %v1816
    %v1818 = vpop.f32.mrf.mxu0
    %v1819 = vadd.f32 0.0, %v1818
    %1820 = vmatmul.bf16.gmra.mxu0 %v1743
    %v1821 = vpop.f32.mrf.mxu0
    %v1822 = vadd.f32 0.0, %v1821
    %v1823 = vpop.f32.mrf.mxu0
    %v1824 = vadd.f32 0.0, %v1823
    %1825 = vmatmul.bf16.gmra.mxu0 %v1746
    %v1826 = vpop.f32.mrf.mxu0
    %v1827 = vadd.f32 0.0, %v1826
    %v1828 = vpop.f32.mrf.mxu0
    %1829 = vdwg.mxu0
    %1830 = vmatpush.bf16.msra.mxu0 0
    %1831 = vmatpush.bf16.msra.mxu0 0
    %1832 = vmatpush.bf16.msra.mxu0 0
    %1833 = vmatpush.bf16.msra.mxu0 0
    %1834 = vmatpush.bf16.msra.mxu0 0
    %1835 = vmatpush.bf16.msra.mxu0 0
    %1836 = vmatpush.bf16.msra.mxu0 0
    %1837 = vmatpush.bf16.msra.mxu0 %v1759
    %1838 = vmatmul.bf16.gmra.mxu0 %v1740
    %v1839 = vpop.f32.mrf.mxu0
    %v1840 = vadd.f32 0.0, %v1839
    %v1841 = vpop.f32.mrf.mxu0
    %v1842 = vadd.f32 0.0, %v1841
    %1843 = vmatmul.bf16.gmra.mxu0 %v1743
    %v1844 = vpop.f32.mrf.mxu0
    %v1845 = vadd.f32 0.0, %v1844
    %v1846 = vpop.f32.mrf.mxu0
    %v1847 = vadd.f32 0.0, %v1846
    %1848 = vmatmul.bf16.gmra.mxu0 %v1746
    %v1849 = vpop.f32.mrf.mxu0
    %v1850 = vadd.f32 0.0, %v1849
    %v1851 = vpop.f32.mrf.mxu0
    %1852 = vdwg.mxu0
    %1853 = vst [vmem:[#allocation2 + $0x8] sm:$0xff] %v1771
    %1854 = vst [vmem:[#allocation2 + $0x10] sm:$0xff] %v1794
    %1855 = vst [vmem:[#allocation2 + $0x18] sm:$0xff] %v1817
    %1856 = vst [vmem:[#allocation2 + $0x20] sm:$0xff] %v1840
    %1857 = vst [vmem:[#allocation2 + $0x38] sm:$0xff] %v1773
    %1858 = vst [vmem:[#allocation2 + $0x40] sm:$0xff] %v1796
    %1859 = vst [vmem:[#allocation2 + $0x48] sm:$0xff] %v1819
    %1860 = vst [vmem:[#allocation2 + $0x50] sm:$0xff] %v1842
    %1861 = vst [vmem:[#allocation2 + $0x68] sm:$0xff] %v1776
    %1862 = vst [vmem:[#allocation2 + $0x70] sm:$0xff] %v1799
    %1863 = vst [vmem:[#allocation2 + $0x78] sm:$0xff] %v1822
    %1864 = vst [vmem:[#allocation2 + $0x80] sm:$0xff] %v1845
    %1865 = vst [vmem:[#allocation2 + $0x98] sm:$0xff] %v1778
    %1866 = vst [vmem:[#allocation2 + $0xa0] sm:$0xff] %v1801
    %1867 = vst [vmem:[#allocation2 + $0xa8] sm:$0xff] %v1824
    %1868 = vst [vmem:[#allocation2 + $0xb0] sm:$0xff] %v1847
    %1869 = vst [vmem:[#allocation2 + $0xc8] sm:$0xf] %v1781
    %1870 = vst [vmem:[#allocation2 + $0xd0] sm:$0xf] %v1804
    %1871 = vst [vmem:[#allocation2 + $0xd8] sm:$0xf] %v1827
    %1872 = vst [vmem:[#allocation2 + $0xe0] sm:$0xf] %v1850
    %v1873 = vld [vmem:[#allocation2 + $0x68] sm:$0xf]
    %v1874 = vld [vmem:[#allocation2 + $0x70] sm:$0xf]
    %v1875 = vld [vmem:[#allocation2 + $0x78] sm:$0xf]
    %v1876 = vld [vmem:[#allocation2 + $0x80] sm:$0xf]
    %v1877 = vld [vmem:[#allocation2] sm:$0xf]
    %v1878 = vld [vmem:[#allocation2 + $0x8] sm:$0xf]
    %v1879 = vld [vmem:[#allocation2 + $0x10] sm:$0xf]
    %v1880 = vld [vmem:[#allocation2 + $0x18] sm:$0xf]
    %v1881 = vld [vmem:[#allocation2 + $0x20] sm:$0xf]
    %v1882 = vld [vmem:[%s1] ss:$8 sm:$0xf]
    %v1884 = vperm.slane %v1882, 0
    %v1885 = vperm.slane %v1882, 1
    %v1886 = vperm.slane %v1882, 2
    %v1887 = vperm.slane %v1882, 3
    %1888 = vrot.lane.b32.xlu0 %v1884, 111
    %v1889 = vpop.permute.xlu0 %1888
    %1890 = vrot.lane.b32.xlu0 %v1885, 111
    %v1891 = vpop.permute.xlu0 %1890
    %1892 = vrot.lane.b32.xlu0 %v1886, 111
    %v1893 = vpop.permute.xlu0 %1892
    %1894 = vrot.lane.b32.xlu0 %v1887, 111
    %v1895 = vpop.permute.xlu0 %1894
    %v1896 = vsel %vm366, %v1889, %v1891
    %v1897 = vsel %vm366, %v1891, %v1893
    %v1898 = vsel %vm366, %v1893, %v1895
    %v1904 = vmul.f32 %v1877, %v1889
    %v1905 = vmul.f32 %v1878, %v1896
    %v1906 = vmul.f32 %v1879, %v1897
    %v1907 = vmul.f32 %v1880, %v1898
    %v1908 = vmul.f32 %v1881, %v1895
    %1914 = vrot.lane.b32.xlu0 %v1904, 17
    %v1915 = vpop.permute.xlu0 %1914
    %1916 = vrot.lane.b32.xlu0 %v1905, 17
    %v1917 = vpop.permute.xlu0 %1916
    %1918 = vrot.lane.b32.xlu0 %v1906, 17
    %v1919 = vpop.permute.xlu0 %1918
    %1920 = vrot.lane.b32.xlu0 %v1907, 17
    %v1921 = vpop.permute.xlu0 %1920
    %1922 = vrot.lane.b32.xlu0 %v1908, 17
    %v1923 = vpop.permute.xlu0 %1922
    %v1924 = vsel %vm395, %v1915, %v1917
    %v1925 = vsel %vm395, %v1917, %v1919
    %v1926 = vsel %vm395, %v1919, %v1921
    %v1927 = vsel %vm395, %v1921, %v1923
    %v1932 = vadd.f32 %v1873, %v1924
    %v1933 = vadd.f32 %v1874, %v1925
    %v1934 = vadd.f32 %v1875, %v1926
    %v1935 = vadd.f32 %v1876, %v1927
    %v1936 = vld [vmem:[#allocation2] sm:$0xf0]
    %v1937 = vld [vmem:[#allocation2 + $0x8] sm:$0xf0]
    %v1938 = vld [vmem:[#allocation2 + $0x10] sm:$0xf0]
    %v1939 = vld [vmem:[#allocation2 + $0x18] sm:$0xf0]
    %v1940 = vld [vmem:[#allocation2 + $0x20] sm:$0xf0]
    %v1941 = vld [vmem:[%s413] ss:$8 sm:$0xf]
    %v1943 = vperm.slane %v1941, 0
    %v1944 = vperm.slane %v1941, 1
    %v1945 = vperm.slane %v1941, 2
    %v1946 = vperm.slane %v1941, 3
    %1947 = vrot.lane.b32.xlu0 %v1943, 112
    %v1948 = vpop.permute.xlu0 %1947
    %1949 = vrot.lane.b32.xlu0 %v1944, 112
    %v1950 = vpop.permute.xlu0 %1949
    %1951 = vrot.lane.b32.xlu0 %v1945, 112
    %v1952 = vpop.permute.xlu0 %1951
    %1953 = vrot.lane.b32.xlu0 %v1946, 112
    %v1954 = vpop.permute.xlu0 %1953
    %v1955 = vsel %vm428, %v1948, %v1950
    %v1956 = vsel %vm428, %v1950, %v1952
    %v1957 = vsel %vm428, %v1952, %v1954
    %v1963 = vmul.f32 %v1936, %v1948
    %v1964 = vmul.f32 %v1937, %v1955
    %v1965 = vmul.f32 %v1938, %v1956
    %v1966 = vmul.f32 %v1939, %v1957
    %v1967 = vmul.f32 %v1940, %v1954
    %v1973 = vrot.slane %v1963, 4
    %v1974 = vrot.slane %v1964, 4
    %v1975 = vrot.slane %v1965, 4
    %v1976 = vrot.slane %v1966, 4
    %v1977 = vrot.slane %v1967, 4
    %1978 = vrot.lane.b32.xlu0 %v1973, 16
    %v1979 = vpop.permute.xlu0 %1978
    %1980 = vrot.lane.b32.xlu0 %v1974, 16
    %v1981 = vpop.permute.xlu0 %1980
    %1982 = vrot.lane.b32.xlu0 %v1975, 16
    %v1983 = vpop.permute.xlu0 %1982
    %1984 = vrot.lane.b32.xlu0 %v1976, 16
    %v1985 = vpop.permute.xlu0 %1984
    %1986 = vrot.lane.b32.xlu0 %v1977, 16
    %v1987 = vpop.permute.xlu0 %1986
    %v1988 = vsel %vm462, %v1979, %v1981
    %v1989 = vsel %vm462, %v1981, %v1983
    %v1990 = vsel %vm462, %v1983, %v1985
    %v1991 = vsel %vm462, %v1985, %v1987
    %v1996 = vadd.f32 %v1932, %v1988
    %v1997 = vadd.f32 %v1933, %v1989
    %v1998 = vadd.f32 %v1934, %v1990
    %v1999 = vadd.f32 %v1935, %v1991
    %v2000 = vld [vmem:[#allocation2 + $0x30] sm:$0xf]
    %v2001 = vld [vmem:[#allocation2 + $0x38] sm:$0xf]
    %v2002 = vld [vmem:[#allocation2 + $0x40] sm:$0xf]
    %v2003 = vld [vmem:[#allocation2 + $0x48] sm:$0xf]
    %v2004 = vld [vmem:[#allocation2 + $0x50] sm:$0xf]
    %v2005 = vld [vmem:[%s480] ss:$8 sm:$0xf]
    %v2007 = vperm.slane %v2005, 0
    %v2008 = vperm.slane %v2005, 1
    %v2009 = vperm.slane %v2005, 2
    %v2010 = vperm.slane %v2005, 3
    %2011 = vrot.lane.b32.xlu0 %v2007, 113
    %v2012 = vpop.permute.xlu0 %2011
    %2013 = vrot.lane.b32.xlu0 %v2008, 113
    %v2014 = vpop.permute.xlu0 %2013
    %2015 = vrot.lane.b32.xlu0 %v2009, 113
    %v2016 = vpop.permute.xlu0 %2015
    %2017 = vrot.lane.b32.xlu0 %v2010, 113
    %v2018 = vpop.permute.xlu0 %2017
    %v2019 = vsel %vm495, %v2012, %v2014
    %v2020 = vsel %vm495, %v2014, %v2016
    %v2021 = vsel %vm495, %v2016, %v2018
    %v2027 = vmul.f32 %v2000, %v2012
    %v2028 = vmul.f32 %v2001, %v2019
    %v2029 = vmul.f32 %v2002, %v2020
    %v2030 = vmul.f32 %v2003, %v2021
    %v2031 = vmul.f32 %v2004, %v2018
    %2037 = vrot.lane.b32.xlu0 %v2027, 15
    %v2038 = vpop.permute.xlu0 %2037
    %2039 = vrot.lane.b32.xlu0 %v2028, 15
    %v2040 = vpop.permute.xlu0 %2039
    %2041 = vrot.lane.b32.xlu0 %v2029, 15
    %v2042 = vpop.permute.xlu0 %2041
    %2043 = vrot.lane.b32.xlu0 %v2030, 15
    %v2044 = vpop.permute.xlu0 %2043
    %2045 = vrot.lane.b32.xlu0 %v2031, 15
    %v2046 = vpop.permute.xlu0 %2045
    %v2047 = vsel %vm524, %v2038, %v2040
    %v2048 = vsel %vm524, %v2040, %v2042
    %v2049 = vsel %vm524, %v2042, %v2044
    %v2050 = vsel %vm524, %v2044, %v2046
    %v2055 = vadd.f32 %v1996, %v2047
    %v2056 = vadd.f32 %v1997, %v2048
    %v2057 = vadd.f32 %v1998, %v2049
    %v2058 = vadd.f32 %v1999, %v2050
    %v2059 = vld [vmem:[#allocation2 + $0x30] sm:$0xf0]
    %v2060 = vld [vmem:[#allocation2 + $0x38] sm:$0xf0]
    %v2061 = vld [vmem:[#allocation2 + $0x40] sm:$0xf0]
    %v2062 = vld [vmem:[#allocation2 + $0x48] sm:$0xf0]
    %v2063 = vld [vmem:[#allocation2 + $0x50] sm:$0xf0]
    %v2064 = vld [vmem:[%s542] ss:$8 sm:$0xf]
    %v2066 = vperm.slane %v2064, 0
    %v2067 = vperm.slane %v2064, 1
    %v2068 = vperm.slane %v2064, 2
    %v2069 = vperm.slane %v2064, 3
    %2070 = vrot.lane.b32.xlu0 %v2066, 127
    %v2071 = vpop.permute.xlu0 %2070
    %2072 = vrot.lane.b32.xlu0 %v2067, 127
    %v2073 = vpop.permute.xlu0 %2072
    %2074 = vrot.lane.b32.xlu0 %v2068, 127
    %v2075 = vpop.permute.xlu0 %2074
    %2076 = vrot.lane.b32.xlu0 %v2069, 127
    %v2077 = vpop.permute.xlu0 %2076
    %v2078 = vsel %vm557, %v2071, %v2073
    %v2079 = vsel %vm557, %v2073, %v2075
    %v2080 = vsel %vm557, %v2075, %v2077
    %v2086 = vmul.f32 %v2059, %v2071
    %v2087 = vmul.f32 %v2060, %v2078
    %v2088 = vmul.f32 %v2061, %v2079
    %v2089 = vmul.f32 %v2062, %v2080
    %v2090 = vmul.f32 %v2063, %v2077
    %v2096 = vrot.slane %v2086, 4
    %v2097 = vrot.slane %v2087, 4
    %v2098 = vrot.slane %v2088, 4
    %v2099 = vrot.slane %v2089, 4
    %v2100 = vrot.slane %v2090, 4
    %2101 = vrot.lane.b32.xlu0 %v2096, 1
    %v2102 = vpop.permute.xlu0 %2101
    %2103 = vrot.lane.b32.xlu0 %v2097, 1
    %v2104 = vpop.permute.xlu0 %2103
    %2105 = vrot.lane.b32.xlu0 %v2098, 1
    %v2106 = vpop.permute.xlu0 %2105
    %2107 = vrot.lane.b32.xlu0 %v2099, 1
    %v2108 = vpop.permute.xlu0 %2107
    %2109 = vrot.lane.b32.xlu0 %v2100, 1
    %v2110 = vpop.permute.xlu0 %2109
    %v2111 = vsel %vm591, %v2102, %v2104
    %v2112 = vsel %vm591, %v2104, %v2106
    %v2113 = vsel %vm591, %v2106, %v2108
    %v2114 = vsel %vm591, %v2108, %v2110
    %v2119 = vadd.f32 %v2055, %v2111
    %v2120 = vadd.f32 %v2056, %v2112
    %v2121 = vadd.f32 %v2057, %v2113
    %v2122 = vadd.f32 %v2058, %v2114
    %v2123 = vld [vmem:[#allocation2 + $0x68] sm:$0xf0]
    %v2124 = vld [vmem:[#allocation2 + $0x70] sm:$0xf0]
    %v2125 = vld [vmem:[#allocation2 + $0x78] sm:$0xf0]
    %v2126 = vld [vmem:[#allocation2 + $0x80] sm:$0xf0]
    %v2127 = vld [vmem:[#allocation2 + $0x88] sm:$0xf0]
    %v2128 = vld [vmem:[%s609] ss:$8 sm:$0xf]
    %v2130 = vperm.slane %v2128, 0
    %v2131 = vperm.slane %v2128, 1
    %v2132 = vperm.slane %v2128, 2
    %v2133 = vperm.slane %v2128, 3
    %2134 = vrot.lane.b32.xlu0 %v2130, 1
    %v2135 = vpop.permute.xlu0 %2134
    %2136 = vrot.lane.b32.xlu0 %v2131, 1
    %v2137 = vpop.permute.xlu0 %2136
    %2138 = vrot.lane.b32.xlu0 %v2132, 1
    %v2139 = vpop.permute.xlu0 %2138
    %2140 = vrot.lane.b32.xlu0 %v2133, 1
    %v2141 = vpop.permute.xlu0 %2140
    %v2142 = vsel %vm591, %v2135, %v2137
    %v2143 = vsel %vm591, %v2137, %v2139
    %v2144 = vsel %vm591, %v2139, %v2141
    %v2150 = vmul.f32 %v2123, %v2135
    %v2151 = vmul.f32 %v2124, %v2142
    %v2152 = vmul.f32 %v2125, %v2143
    %v2153 = vmul.f32 %v2126, %v2144
    %v2154 = vmul.f32 %v2127, %v2141
    %v2160 = vrot.slane %v2150, 4
    %v2161 = vrot.slane %v2151, 4
    %v2162 = vrot.slane %v2152, 4
    %v2163 = vrot.slane %v2153, 4
    %v2164 = vrot.slane %v2154, 4
    %2165 = vrot.lane.b32.xlu0 %v2160, 127
    %v2166 = vpop.permute.xlu0 %2165
    %2167 = vrot.lane.b32.xlu0 %v2161, 127
    %v2168 = vpop.permute.xlu0 %2167
    %2169 = vrot.lane.b32.xlu0 %v2162, 127
    %v2170 = vpop.permute.xlu0 %2169
    %2171 = vrot.lane.b32.xlu0 %v2163, 127
    %v2172 = vpop.permute.xlu0 %2171
    %2173 = vrot.lane.b32.xlu0 %v2164, 127
    %v2174 = vpop.permute.xlu0 %2173
    %v2175 = vsel %vm557, %v2166, %v2168
    %v2176 = vsel %vm557, %v2168, %v2170
    %v2177 = vsel %vm557, %v2170, %v2172
    %v2178 = vsel %vm557, %v2172, %v2174
    %v2183 = vadd.f32 %v2119, %v2175
    %v2184 = vadd.f32 %v2120, %v2176
    %v2185 = vadd.f32 %v2121, %v2177
    %v2186 = vadd.f32 %v2122, %v2178
    %v2187 = vld [vmem:[#allocation2 + $0x98] sm:$0xf]
    %v2188 = vld [vmem:[#allocation2 + $0xa0] sm:$0xf]
    %v2189 = vld [vmem:[#allocation2 + $0xa8] sm:$0xf]
    %v2190 = vld [vmem:[#allocation2 + $0xb0] sm:$0xf]
    %v2191 = vld [vmem:[#allocation2 + $0xb8] sm:$0xf]
    %v2192 = vld [vmem:[%s674] ss:$8 sm:$0xf]
    %v2194 = vperm.slane %v2192, 0
    %v2195 = vperm.slane %v2192, 1
    %v2196 = vperm.slane %v2192, 2
    %v2197 = vperm.slane %v2192, 3
    %2198 = vrot.lane.b32.xlu0 %v2194, 15
    %v2199 = vpop.permute.xlu0 %2198
    %2200 = vrot.lane.b32.xlu0 %v2195, 15
    %v2201 = vpop.permute.xlu0 %2200
    %2202 = vrot.lane.b32.xlu0 %v2196, 15
    %v2203 = vpop.permute.xlu0 %2202
    %2204 = vrot.lane.b32.xlu0 %v2197, 15
    %v2205 = vpop.permute.xlu0 %2204
    %v2206 = vsel %vm524, %v2199, %v2201
    %v2207 = vsel %vm524, %v2201, %v2203
    %v2208 = vsel %vm524, %v2203, %v2205
    %v2214 = vmul.f32 %v2187, %v2199
    %v2215 = vmul.f32 %v2188, %v2206
    %v2216 = vmul.f32 %v2189, %v2207
    %v2217 = vmul.f32 %v2190, %v2208
    %v2218 = vmul.f32 %v2191, %v2205
    %2224 = vrot.lane.b32.xlu0 %v2214, 113
    %v2225 = vpop.permute.xlu0 %2224
    %2226 = vrot.lane.b32.xlu0 %v2215, 113
    %v2227 = vpop.permute.xlu0 %2226
    %2228 = vrot.lane.b32.xlu0 %v2216, 113
    %v2229 = vpop.permute.xlu0 %2228
    %2230 = vrot.lane.b32.xlu0 %v2217, 113
    %v2231 = vpop.permute.xlu0 %2230
    %2232 = vrot.lane.b32.xlu0 %v2218, 113
    %v2233 = vpop.permute.xlu0 %2232
    %v2234 = vsel %vm495, %v2225, %v2227
    %v2235 = vsel %vm495, %v2227, %v2229
    %v2236 = vsel %vm495, %v2229, %v2231
    %v2237 = vsel %vm495, %v2231, %v2233
    %v2242 = vadd.f32 %v2183, %v2234
    %v2243 = vadd.f32 %v2184, %v2235
    %v2244 = vadd.f32 %v2185, %v2236
    %v2245 = vadd.f32 %v2186, %v2237
    %v2246 = vld [vmem:[#allocation2 + $0x98] sm:$0xf0]
    %v2247 = vld [vmem:[#allocation2 + $0xa0] sm:$0xf0]
    %v2248 = vld [vmem:[#allocation2 + $0xa8] sm:$0xf0]
    %v2249 = vld [vmem:[#allocation2 + $0xb0] sm:$0xf0]
    %v2250 = vld [vmem:[#allocation2 + $0xb8] sm:$0xf0]
    %v2251 = vld [vmem:[%s734] ss:$8 sm:$0xf]
    %v2253 = vperm.slane %v2251, 0
    %v2254 = vperm.slane %v2251, 1
    %v2255 = vperm.slane %v2251, 2
    %v2256 = vperm.slane %v2251, 3
    %2257 = vrot.lane.b32.xlu0 %v2253, 16
    %v2258 = vpop.permute.xlu0 %2257
    %2259 = vrot.lane.b32.xlu0 %v2254, 16
    %v2260 = vpop.permute.xlu0 %2259
    %2261 = vrot.lane.b32.xlu0 %v2255, 16
    %v2262 = vpop.permute.xlu0 %2261
    %2263 = vrot.lane.b32.xlu0 %v2256, 16
    %v2264 = vpop.permute.xlu0 %2263
    %v2265 = vsel %vm462, %v2258, %v2260
    %v2266 = vsel %vm462, %v2260, %v2262
    %v2267 = vsel %vm462, %v2262, %v2264
    %v2273 = vmul.f32 %v2246, %v2258
    %v2274 = vmul.f32 %v2247, %v2265
    %v2275 = vmul.f32 %v2248, %v2266
    %v2276 = vmul.f32 %v2249, %v2267
    %v2277 = vmul.f32 %v2250, %v2264
    %v2283 = vrot.slane %v2273, 4
    %v2284 = vrot.slane %v2274, 4
    %v2285 = vrot.slane %v2275, 4
    %v2286 = vrot.slane %v2276, 4
    %v2287 = vrot.slane %v2277, 4
    %2288 = vrot.lane.b32.xlu0 %v2283, 112
    %v2289 = vpop.permute.xlu0 %2288
    %2290 = vrot.lane.b32.xlu0 %v2284, 112
    %v2291 = vpop.permute.xlu0 %2290
    %2292 = vrot.lane.b32.xlu0 %v2285, 112
    %v2293 = vpop.permute.xlu0 %2292
    %2294 = vrot.lane.b32.xlu0 %v2286, 112
    %v2295 = vpop.permute.xlu0 %2294
    %2296 = vrot.lane.b32.xlu0 %v2287, 112
    %v2297 = vpop.permute.xlu0 %2296
    %v2298 = vsel %vm428, %v2289, %v2291
    %v2299 = vsel %vm428, %v2291, %v2293
    %v2300 = vsel %vm428, %v2293, %v2295
    %v2301 = vsel %vm428, %v2295, %v2297
    %v2306 = vadd.f32 %v2242, %v2298
    %v2307 = vadd.f32 %v2243, %v2299
    %v2308 = vadd.f32 %v2244, %v2300
    %v2309 = vadd.f32 %v2245, %v2301
    %v2310 = vld [vmem:[#allocation2 + $0xc8] sm:$0xf]
    %v2311 = vld [vmem:[#allocation2 + $0xd0] sm:$0xf]
    %v2312 = vld [vmem:[#allocation2 + $0xd8] sm:$0xf]
    %v2313 = vld [vmem:[#allocation2 + $0xe0] sm:$0xf]
    %v2314 = vld [vmem:[#allocation2 + $0xe8] sm:$0xf]
    %v2315 = vld [vmem:[%s799] ss:$8 sm:$0xf]
    %v2317 = vperm.slane %v2315, 0
    %v2318 = vperm.slane %v2315, 1
    %v2319 = vperm.slane %v2315, 2
    %v2320 = vperm.slane %v2315, 3
    %2321 = vrot.lane.b32.xlu0 %v2317, 17
    %v2322 = vpop.permute.xlu0 %2321
    %2323 = vrot.lane.b32.xlu0 %v2318, 17
    %v2324 = vpop.permute.xlu0 %2323
    %2325 = vrot.lane.b32.xlu0 %v2319, 17
    %v2326 = vpop.permute.xlu0 %2325
    %2327 = vrot.lane.b32.xlu0 %v2320, 17
    %v2328 = vpop.permute.xlu0 %2327
    %v2329 = vsel %vm395, %v2322, %v2324
    %v2330 = vsel %vm395, %v2324, %v2326
    %v2331 = vsel %vm395, %v2326, %v2328
    %v2337 = vmul.f32 %v2310, %v2322
    %v2338 = vmul.f32 %v2311, %v2329
    %v2339 = vmul.f32 %v2312, %v2330
    %v2340 = vmul.f32 %v2313, %v2331
    %v2341 = vmul.f32 %v2314, %v2328
    %2347 = vrot.lane.b32.xlu0 %v2337, 111
    %v2348 = vpop.permute.xlu0 %2347
    %2349 = vrot.lane.b32.xlu0 %v2338, 111
    %v2350 = vpop.permute.xlu0 %2349
    %2351 = vrot.lane.b32.xlu0 %v2339, 111
    %v2352 = vpop.permute.xlu0 %2351
    %2353 = vrot.lane.b32.xlu0 %v2340, 111
    %v2354 = vpop.permute.xlu0 %2353
    %2355 = vrot.lane.b32.xlu0 %v2341, 111
    %v2356 = vpop.permute.xlu0 %2355
    %v2357 = vsel %vm366, %v2348, %v2350
    %v2358 = vsel %vm366, %v2350, %v2352
    %v2359 = vsel %vm366, %v2352, %v2354
    %v2360 = vsel %vm366, %v2354, %v2356
    %v2365 = vadd.f32 %v2306, %v2357
    %v2366 = vadd.f32 %v2307, %v2358
    %v2367 = vadd.f32 %v2308, %v2359
    %v2368 = vadd.f32 %v2309, %v2360
    %v2373 = vrot.slane %v2365, 4
    %v2374 = vrot.slane %v2366, 4
    %v2375 = vrot.slane %v2367, 4
    %v2376 = vrot.slane %v2368, 4
    %2381 = vst [vmem:[#allocation5 + $0x20] sm:$0xf0] %v2373
    %2382 = vst [vmem:[#allocation5 + $0x28] sm:$0xf0] %v2374
    %2383 = vst [vmem:[#allocation5 + $0x30] sm:$0xf0] %v2375
    %2384 = vst [vmem:[#allocation5 + $0x38] sm:$0xf0] %v2376
    // Predicated region
    $region46: #{tpu_custom_call.1} parent=1 // pred_check
      _
    $region47: #{tpu_custom_call.1} parent=1 // pred_check_branch
      %2386 = sbr.rel (0) target = $region49
    $region48: #{tpu_custom_call.1} parent=1 // pred_region
      %2388 = vsyncadd [#allocation6], 0
      %s2389 = sshll.u32 [#allocation5], 4
      %s2390 = int_to_ptr.vmem [resolvable:$true] %s2389
      %s2391 = sshll.u32 %s11, 4
      %s2392 = int_to_ptr.hbm [resolvable:$true] %s2391
      %2397 = dma.vmem_to_hbm [thread:$0]  %s2390, 1024, %s2392, [#allocation6], 512, 512, 32
    $region49: #{tpu_custom_call.1} parent=1 // pred_fallthru
      _
    // Predicated region
    $region50: #{tpu_custom_call.1} parent=1 // pred_check
      _
    $region51: #{tpu_custom_call.1} parent=1 // pred_check_branch
      %2399 = sbr.rel (0) target = $region53
    $region52: #{tpu_custom_call.1} parent=1 // pred_region
      %2401 = dma.done [#allocation6], 1024
    $region53: #{tpu_custom_call.1} parent=1 // pred_fallthru
      _
    %2402 = vsyncpa [#allocation6], 1

</llo_original>
